<compile_context>
chip_gen: v7x
topology: tpu7x:2x2x1
jax: 0.10.0
libtpu: 0.0.40
codegen_flags: <defaults>
</compile_context>

<pallas_src>
import jax
import jax.numpy as jnp
from jax import lax
from jax.experimental import pallas as pl
from jax.experimental.pallas import tpu as pltpu


def _round_up(x, m):
    return ((x + m - 1) // m) * m


def _vmem_capacity_bytes():
    """Physical VMEM of the local TPU; falls back to the smallest (v7x, 64 MiB)."""
    try:
        info = pltpu.get_tpu_info()
        for name in ("vmem_capacity_bytes", "vmem_size_bytes", "vmem_bytes"):
            val = getattr(info, name, None)
            if val:
                return int(val)
    except Exception:
        pass
    return 64 * 1024 * 1024


def _const_index_map(nd):
    def im(i):
        return (0,) * nd
    return im


def _irm_mlp_kernel(x_ref,
                    w1_ref, b1_ref, w2_ref, b2_ref, w3_ref, b3_ref,
                    w4_ref, b4_ref, w5_ref, b5_ref,
                    oT_ref):
    """Whole 5-layer MLP for one token tile, entirely in VMEM.

    x_ref:  (tm, H)   natural layout; layer 1 contracts over H via an "NT"
                      dot_general, so no wrapper-side transpose is needed.
    w*_ref: (out_features, in_features)  -- pre-transposed once in the wrapper.
    b*_ref: (out_features, 1)  f32       -- broadcast along the lane/token axis.
    oT_ref: (H*NL, tm)                   -- lane-dense output (tokens on lanes).
    """
    cdt = w1_ref.dtype  # MXU operand dtype (bf16 by default, f32 optional)

    # Layer 1: (L, H) x (tm, H) contracting H -> (L, tm).
    h = lax.dot_general(w1_ref[...], x_ref[...].astype(cdt),
                        dimension_numbers=(((1,), (1,)), ((), ())),
                        preferred_element_type=jnp.float32)
    h = jnp.maximum(h + b1_ref[...], 0.0).astype(cdt)

    h = jnp.dot(w2_ref[...], h, preferred_element_type=jnp.float32)
    h = jnp.maximum(h + b2_ref[...], 0.0).astype(cdt)

    h = jnp.dot(w3_ref[...], h, preferred_element_type=jnp.float32)
    h = jnp.maximum(h + b3_ref[...], 0.0).astype(cdt)

    h = jnp.dot(w4_ref[...], h, preferred_element_type=jnp.float32)
    h = jnp.maximum(h + b4_ref[...], 0.0).astype(cdt)

    out = jnp.dot(w5_ref[...], h, preferred_element_type=jnp.float32)
    oT_ref[...] = (out + b5_ref[...]).astype(oT_ref.dtype)


def irm_forward(x, params, *, hidden_size, num_layers, tm=None,
                compute_dtype=jnp.bfloat16):
    """Pallas implementation of IRM.forward (the nn.Sequential MLP).

    Args:
      x: (B, S, H) activations.
      params: dict with w1..w5 of shape (in, out) and b1..b5 of shape (1, out).
      hidden_size: H.
      num_layers: number of injection layers NL.
      tm: token tile (multiple of 128). None -> generation-aware default.
      compute_dtype: MXU operand dtype (jnp.bfloat16 or jnp.float32).

    Returns:
      weightsT of shape (H * NL, B * S): the lane-dense kernel layout
      (out-features x tokens).  Use irm_weights_view() for the torch-style
      (B, S, H, NL) view, or irm_get_layer_weights()/irm_injected_operation()
      to consume one injection layer without a full HBM transpose.
    """
    B, S, H = x.shape
    assert H == hidden_size
    NL = num_layers
    out_dim = H * NL
    M = B * S
    L = params["w1"].shape[1]                 # linear_size = size_modifier * H

    vmem_cap = _vmem_capacity_bytes()
    vmem_budget = int(0.72 * vmem_cap)        # ~46 MiB on v7x, ~92 MiB v5e/v6e

    # ---- Token tile: multiple of 128 on the lane axis, generation-aware size.
    if tm is None:
        tm = 1024 if vmem_cap >= (96 << 20) else 512
    tm = max(128, min(_round_up(tm, 128), _round_up(M, 128)))
    # >= 2 grid steps whenever possible so v7x's two TensorCores both run.
    while tm > 128 and _round_up(M, tm) // tm < 2:
        tm = max(128, _round_up(tm // 2, 128))

    w_itemsize = jnp.dtype(compute_dtype).itemsize
    weight_bytes = ((H * L + 3 * L * L + L * out_dim) * w_itemsize
                    + (4 * L + out_dim) * 4)

    def vmem_estimate(t):
        # single-buffered resident weights + double-buffered x/out tiles
        # + live f32/compute intermediates of the widest layers.
        tile_io = 2 * t * (H + out_dim) * x.dtype.itemsize
        live = t * (3 * max(L, out_dim) + out_dim) * 4
        return weight_bytes + tile_io + live

    while tm > 128 and vmem_estimate(tm) > vmem_budget:
        tm = max(128, _round_up(tm // 2, 128))
    est = vmem_estimate(tm)
    assert est <= vmem_budget, (
        f"IRM weights/tile do not fit in VMEM ({est} > {vmem_budget} bytes); "
        "shrink the hidden/linear size or shard the output features.")

    M_pad = _round_up(M, tm)
    xp = x.reshape(M, H)
    if M_pad != M:                            # no-op when B*S is a tm multiple
        xp = jnp.pad(xp, ((0, M_pad - M), (0, 0)))

    # Weights -> (out, in) in the MXU-operand dtype; biases -> (out, 1) f32.
    flat_params = []
    for i in range(1, 6):
        flat_params.append(params[f"w{i}"].T.astype(compute_dtype))
        flat_params.append(params[f"b{i}"].reshape(-1, 1).astype(jnp.float32))
    flat_params = tuple(flat_params)

    flops = 2 * M_pad * (H * L + 3 * L * L + L * out_dim)
    bytes_accessed = M_pad * (H + out_dim) * x.dtype.itemsize + weight_bytes
    cost = pl.CostEstimate(flops=int(flops), transcendentals=0,
                           bytes_accessed=int(bytes_accessed))

    compiler_kwargs = dict(dimension_semantics=("parallel",))
    if est > (8 << 20):   # default scoped VMEM (16 MiB on v5e) may be tight
        compiler_kwargs["vmem_limit_bytes"] = int(
            min(max(int(1.4 * est), 16 << 20), vmem_cap - (4 << 20)))

    def run(single_buffer_weights):
        def const_spec(shape):
            kwargs = {}
            if single_buffer_weights:
                # Grid-constant block: never re-fetched -> one VMEM buffer.
                kwargs["pipeline_mode"] = pl.Buffered(1)
            return pl.BlockSpec(shape, _const_index_map(len(shape)), **kwargs)

        in_specs = [pl.BlockSpec((tm, H), lambda i: (i, 0))]
        in_specs += [const_spec(p.shape) for p in flat_params]

        return pl.pallas_call(
            _irm_mlp_kernel,
            out_shape=jax.ShapeDtypeStruct((out_dim, M_pad), x.dtype),
            grid_spec=pltpu.PrefetchScalarGridSpec(
                num_scalar_prefetch=0,
                grid=(M_pad // tm,),
                in_specs=in_specs,
                out_specs=pl.BlockSpec((out_dim, tm), lambda i: (0, i)),
            ),
            compiler_params=pltpu.CompilerParams(**compiler_kwargs),
            cost_estimate=cost,
        )(xp, *flat_params)

    try:
        outT = run(True)     # single-buffer the constant weight blocks
    except Exception:
        outT = run(False)    # fallback: default double-buffering

    if M_pad != M:
        outT = outT[:, :M]
    return outT


def irm_weights_view(weightsT, B, S, hidden_size, num_layers):
    """(H*NL, B*S) -> torch-style (B, S, H, NL) view (materializes a transpose)."""
    return weightsT.T.reshape(B, S, hidden_size, num_layers)


def irm_get_layer_weights(weightsT, layer_id, injection_layers, B, S,
                          hidden_size, num_layers):
    """IRM.get_layer_weights on the lane-dense layout -> (B, S, H).

    Only H rows are moved; the full (B, S, H, NL) transpose is never written
    to HBM.
    """
    idx = injection_layers.index(layer_id)
    rows = weightsT.reshape(hidden_size, num_layers, B * S)[:, idx, :]   # (H, M)
    return rows.T.reshape(B, S, hidden_size)


def irm_injected_operation(weightsT, layer_id, injection_layers, llm_output,
                           active_irm=True):
    """IRM.injected_operation: broadcast-add of the layer slice (elementwise glue)."""
    if not active_irm:
        return llm_output
    B, S, H = llm_output.shape
    nl = len(injection_layers)
    return irm_get_layer_weights(weightsT, layer_id, injection_layers,
                                 B, S, H, nl) + llm_output


def init_irm_params(key, hidden_size, size_modifier, num_layers):
    """Deterministic synthetic parameters (same shapes as the nn.Sequential)."""
    L = hidden_size * size_modifier
    out_dim = hidden_size * num_layers
    dims = [(hidden_size, L), (L, L), (L, L), (L, L), (L, out_dim)]
    params = {}
    for idx, (din, dout) in enumerate(dims, start=1):
        key, kw, kb = jax.random.split(key, 3)
        scale = 1.0 / jnp.sqrt(jnp.float32(din))
        params[f"w{idx}"] = jax.random.normal(kw, (din, dout), jnp.float32) * scale
        params[f"b{idx}"] = jax.random.normal(kb, (1, dout), jnp.float32) * 0.01
    return params


def irm_reference(x, params, hidden_size, num_layers):
    """Plain-JAX f32 reference for correctness checking."""
    B, S, H = x.shape
    h = x.reshape(B * S, H).astype(jnp.float32)
    for i in range(1, 5):
        h = jnp.maximum(h @ params[f"w{i}"] + params[f"b{i}"], 0.0)
    h = h @ params["w5"] + params["b5"]
    return h.reshape(B, S, hidden_size, num_layers).astype(x.dtype)


if __name__ == "__main__":
    # Small config consistent with the module:
    #   hidden_size=32, size_modifier=3 -> linear_size=96,
    #   injection_layers=[1, 3] -> num_layers=2, batch=2, seq=8.
    B, S, H = 2, 8, 32
    size_modifier = 3
    injection_layers = [1, 3]
    NL = len(injection_layers)

    key = jax.random.PRNGKey(0)
    key, kx = jax.random.split(key)
    x = jax.random.normal(kx, (B, S, H), jnp.float32)
    params = init_irm_params(key, H, size_modifier, NL)

    ref = irm_reference(x, params, H, NL)
    ref_scale = float(jnp.max(jnp.abs(ref)))

    # Default path: bf16 MXU operands, f32 accumulation (loose tolerance).
    wT = jax.block_until_ready(
        irm_forward(x, params, hidden_size=H, num_layers=NL))
    assert wT.shape == (H * NL, B * S), wT.shape
    w = irm_weights_view(wT, B, S, H, NL)
    assert w.shape == (B, S, H, NL), w.shape
    bf16_err = float(jnp.max(jnp.abs(w - ref)))
    assert bf16_err <= 0.08 * ref_scale + 0.03, (bf16_err, ref_scale)

    # Exact f32 path (tight tolerance).
    wT32 = jax.block_until_ready(
        irm_forward(x, params, hidden_size=H, num_layers=NL,
                    compute_dtype=jnp.float32))
    w32 = irm_weights_view(wT32, B, S, H, NL)
    f32_err = float(jnp.max(jnp.abs(w32 - ref)))
    assert jnp.allclose(w32, ref, atol=1e-3, rtol=1e-3), f32_err

    # injected_operation: broadcast-add glue outside the kernel, consuming the
    # lane-dense layout directly (no full-weights transpose in HBM).
    # TODO(synk): tensor_logger / heatmap / sparsity logging has no Pallas equivalent.
    llm_out = jax.random.normal(jax.random.PRNGKey(1), (B, S, H), jnp.float32)
    layer_id = injection_layers[1]
    injected = jax.block_until_ready(
        irm_injected_operation(wT, layer_id, injection_layers, llm_out))
    assert injected.shape == (B, S, H), injected.shape

    print("KERNEL_OK")
</pallas_src>

<mosaic_0001>
module attributes {stable_mosaic.version = 11 : i64} {
  func.func @_irm_mlp_kernel(%arg0: i32, %arg1: memref<128x32xf32, #tpu.memory_space<vmem>>, %arg2: memref<96x32xbf16, #tpu.memory_space<vmem>>, %arg3: memref<96x1xf32, #tpu.memory_space<vmem>>, %arg4: memref<96x96xbf16, #tpu.memory_space<vmem>>, %arg5: memref<96x1xf32, #tpu.memory_space<vmem>>, %arg6: memref<96x96xbf16, #tpu.memory_space<vmem>>, %arg7: memref<96x1xf32, #tpu.memory_space<vmem>>, %arg8: memref<96x96xbf16, #tpu.memory_space<vmem>>, %arg9: memref<96x1xf32, #tpu.memory_space<vmem>>, %arg10: memref<64x96xbf16, #tpu.memory_space<vmem>>, %arg11: memref<64x1xf32, #tpu.memory_space<vmem>>, %arg12: memref<64x128xf32, #tpu.memory_space<vmem>>) attributes {dimension_semantics = [#tpu.dimension_semantics<parallel>], iteration_bounds = array<i64: 1>, scalar_prefetch = 0 : i64, scratch_operands = 0 : i64, tpu.core_type = #tpu.core_type<tc>, window_params = [{transform_indices = @transform_0, window_bounds = array<i64: 128, 32>}, {pipeline_mode = #tpu.pipeline_mode<synchronous>, transform_indices = @transform_1, window_bounds = array<i64: 96, 32>}, {pipeline_mode = #tpu.pipeline_mode<synchronous>, transform_indices = @transform_2, window_bounds = array<i64: 96, 1>}, {pipeline_mode = #tpu.pipeline_mode<synchronous>, transform_indices = @transform_3, window_bounds = array<i64: 96, 96>}, {pipeline_mode = #tpu.pipeline_mode<synchronous>, transform_indices = @transform_4, window_bounds = array<i64: 96, 1>}, {pipeline_mode = #tpu.pipeline_mode<synchronous>, transform_indices = @transform_5, window_bounds = array<i64: 96, 96>}, {pipeline_mode = #tpu.pipeline_mode<synchronous>, transform_indices = @transform_6, window_bounds = array<i64: 96, 1>}, {pipeline_mode = #tpu.pipeline_mode<synchronous>, transform_indices = @transform_7, window_bounds = array<i64: 96, 96>}, {pipeline_mode = #tpu.pipeline_mode<synchronous>, transform_indices = @transform_8, window_bounds = array<i64: 96, 1>}, {pipeline_mode = #tpu.pipeline_mode<synchronous>, transform_indices = @transform_9, window_bounds = array<i64: 64, 96>}, {pipeline_mode = #tpu.pipeline_mode<synchronous>, transform_indices = @transform_10, window_bounds = array<i64: 64, 1>}, {transform_indices = @transform_11, window_bounds = array<i64: 64, 128>}]} {
    %c0 = arith.constant 0 : index
    %c0_0 = arith.constant 0 : index
    %0 = vector.load %arg2[%c0, %c0_0] : memref<96x32xbf16, #tpu.memory_space<vmem>>, vector<96x32xbf16>
    %c0_1 = arith.constant 0 : index
    %c0_2 = arith.constant 0 : index
    %1 = vector.load %arg1[%c0_1, %c0_2] : memref<128x32xf32, #tpu.memory_space<vmem>>, vector<128x32xf32>
    %2 = arith.truncf %1 : vector<128x32xf32> to vector<128x32xbf16>
    %cst = arith.constant dense<0.000000e+00> : vector<96x128xf32>
    %3 = tpu.matmul %0, %2, %cst {dimension_numbers = #tpu.dot_dimension_numbers<[1], [1], [0], [0], [0, 0, 1, 0], [], []>} : vector<96x32xbf16>, vector<128x32xbf16>, vector<96x128xf32> -> vector<96x128xf32>
    %c0_3 = arith.constant 0 : index
    %c0_4 = arith.constant 0 : index
    %4 = vector.load %arg3[%c0_3, %c0_4] : memref<96x1xf32, #tpu.memory_space<vmem>>, vector<96x1xf32>
    %5 = vector.broadcast %4 : vector<96x1xf32> to vector<96x128xf32>
    %6 = arith.addf %3, %5 : vector<96x128xf32>
    %cst_5 = arith.constant 0.000000e+00 : f32
    %7 = vector.broadcast %cst_5 : f32 to vector<96x128xf32>
    %8 = arith.maximumf %6, %7 : vector<96x128xf32>
    %9 = arith.truncf %8 : vector<96x128xf32> to vector<96x128xbf16>
    %c0_6 = arith.constant 0 : index
    %c0_7 = arith.constant 0 : index
    %10 = vector.load %arg4[%c0_6, %c0_7] : memref<96x96xbf16, #tpu.memory_space<vmem>>, vector<96x96xbf16>
    %cst_8 = arith.constant dense<0.000000e+00> : vector<96x128xf32>
    %11 = tpu.matmul %10, %9, %cst_8 {dimension_numbers = #tpu.dot_dimension_numbers<[1], [0], [0], [1], [0, 0, 1, 1], [], []>} : vector<96x96xbf16>, vector<96x128xbf16>, vector<96x128xf32> -> vector<96x128xf32>
    %c0_9 = arith.constant 0 : index
    %c0_10 = arith.constant 0 : index
    %12 = vector.load %arg5[%c0_9, %c0_10] : memref<96x1xf32, #tpu.memory_space<vmem>>, vector<96x1xf32>
    %13 = vector.broadcast %12 : vector<96x1xf32> to vector<96x128xf32>
    %14 = arith.addf %11, %13 : vector<96x128xf32>
    %cst_11 = arith.constant 0.000000e+00 : f32
    %15 = vector.broadcast %cst_11 : f32 to vector<96x128xf32>
    %16 = arith.maximumf %14, %15 : vector<96x128xf32>
    %17 = arith.truncf %16 : vector<96x128xf32> to vector<96x128xbf16>
    %c0_12 = arith.constant 0 : index
    %c0_13 = arith.constant 0 : index
    %18 = vector.load %arg6[%c0_12, %c0_13] : memref<96x96xbf16, #tpu.memory_space<vmem>>, vector<96x96xbf16>
    %cst_14 = arith.constant dense<0.000000e+00> : vector<96x128xf32>
    %19 = tpu.matmul %18, %17, %cst_14 {dimension_numbers = #tpu.dot_dimension_numbers<[1], [0], [0], [1], [0, 0, 1, 1], [], []>} : vector<96x96xbf16>, vector<96x128xbf16>, vector<96x128xf32> -> vector<96x128xf32>
    %c0_15 = arith.constant 0 : index
    %c0_16 = arith.constant 0 : index
    %20 = vector.load %arg7[%c0_15, %c0_16] : memref<96x1xf32, #tpu.memory_space<vmem>>, vector<96x1xf32>
    %21 = vector.broadcast %20 : vector<96x1xf32> to vector<96x128xf32>
    %22 = arith.addf %19, %21 : vector<96x128xf32>
    %cst_17 = arith.constant 0.000000e+00 : f32
    %23 = vector.broadcast %cst_17 : f32 to vector<96x128xf32>
    %24 = arith.maximumf %22, %23 : vector<96x128xf32>
    %25 = arith.truncf %24 : vector<96x128xf32> to vector<96x128xbf16>
    %c0_18 = arith.constant 0 : index
    %c0_19 = arith.constant 0 : index
    %26 = vector.load %arg8[%c0_18, %c0_19] : memref<96x96xbf16, #tpu.memory_space<vmem>>, vector<96x96xbf16>
    %cst_20 = arith.constant dense<0.000000e+00> : vector<96x128xf32>
    %27 = tpu.matmul %26, %25, %cst_20 {dimension_numbers = #tpu.dot_dimension_numbers<[1], [0], [0], [1], [0, 0, 1, 1], [], []>} : vector<96x96xbf16>, vector<96x128xbf16>, vector<96x128xf32> -> vector<96x128xf32>
    %c0_21 = arith.constant 0 : index
    %c0_22 = arith.constant 0 : index
    %28 = vector.load %arg9[%c0_21, %c0_22] : memref<96x1xf32, #tpu.memory_space<vmem>>, vector<96x1xf32>
    %29 = vector.broadcast %28 : vector<96x1xf32> to vector<96x128xf32>
    %30 = arith.addf %27, %29 : vector<96x128xf32>
    %cst_23 = arith.constant 0.000000e+00 : f32
    %31 = vector.broadcast %cst_23 : f32 to vector<96x128xf32>
    %32 = arith.maximumf %30, %31 : vector<96x128xf32>
    %33 = arith.truncf %32 : vector<96x128xf32> to vector<96x128xbf16>
    %c0_24 = arith.constant 0 : index
    %c0_25 = arith.constant 0 : index
    %34 = vector.load %arg10[%c0_24, %c0_25] : memref<64x96xbf16, #tpu.memory_space<vmem>>, vector<64x96xbf16>
    %cst_26 = arith.constant dense<0.000000e+00> : vector<64x128xf32>
    %35 = tpu.matmul %34, %33, %cst_26 {dimension_numbers = #tpu.dot_dimension_numbers<[1], [0], [0], [1], [0, 0, 1, 1], [], []>} : vector<64x96xbf16>, vector<96x128xbf16>, vector<64x128xf32> -> vector<64x128xf32>
    %c0_27 = arith.constant 0 : index
    %c0_28 = arith.constant 0 : index
    %36 = vector.load %arg11[%c0_27, %c0_28] : memref<64x1xf32, #tpu.memory_space<vmem>>, vector<64x1xf32>
    %37 = vector.broadcast %36 : vector<64x1xf32> to vector<64x128xf32>
    %38 = arith.addf %35, %37 : vector<64x128xf32>
    %c0_29 = arith.constant 0 : index
    %c0_30 = arith.constant 0 : index
    %39 = vector.load %arg12[%c0_29, %c0_30] : memref<64x128xf32, #tpu.memory_space<vmem>>, vector<64x128xf32>
    tpu.vector_store %arg12[%c0_29, %c0_30], %38 {strides = array<i32>} : memref<64x128xf32, #tpu.memory_space<vmem>>, vector<64x128xf32>,
    return
  }
  func.func @transform_0(%arg0: i32) -> (i32, i32) {
    %c0_i32 = arith.constant 0 : i32
    %c0_i32_0 = arith.constant 0 : i32
    return %arg0, %c0_i32 : i32, i32
  }
  func.func @transform_1(%arg0: i32) -> (i32, i32) {
    %c0_i32 = arith.constant 0 : i32
    %c0_i32_0 = arith.constant 0 : i32
    %c0_i32_1 = arith.constant 0 : i32
    return %c0_i32, %c0_i32_0 : i32, i32
  }
  func.func @transform_2(%arg0: i32) -> (i32, i32) {
    %c0_i32 = arith.constant 0 : i32
    %c0_i32_0 = arith.constant 0 : i32
    %c0_i32_1 = arith.constant 0 : i32
    return %c0_i32, %c0_i32_0 : i32, i32
  }
  func.func @transform_3(%arg0: i32) -> (i32, i32) {
    %c0_i32 = arith.constant 0 : i32
    %c0_i32_0 = arith.constant 0 : i32
    %c0_i32_1 = arith.constant 0 : i32
    return %c0_i32, %c0_i32_0 : i32, i32
  }
  func.func @transform_4(%arg0: i32) -> (i32, i32) {
    %c0_i32 = arith.constant 0 : i32
    %c0_i32_0 = arith.constant 0 : i32
    %c0_i32_1 = arith.constant 0 : i32
    return %c0_i32, %c0_i32_0 : i32, i32
  }
  func.func @transform_5(%arg0: i32) -> (i32, i32) {
    %c0_i32 = arith.constant 0 : i32
    %c0_i32_0 = arith.constant 0 : i32
    %c0_i32_1 = arith.constant 0 : i32
    return %c0_i32, %c0_i32_0 : i32, i32
  }
  func.func @transform_6(%arg0: i32) -> (i32, i32) {
    %c0_i32 = arith.constant 0 : i32
    %c0_i32_0 = arith.constant 0 : i32
    %c0_i32_1 = arith.constant 0 : i32
    return %c0_i32, %c0_i32_0 : i32, i32
  }
  func.func @transform_7(%arg0: i32) -> (i32, i32) {
    %c0_i32 = arith.constant 0 : i32
    %c0_i32_0 = arith.constant 0 : i32
    %c0_i32_1 = arith.constant 0 : i32
    return %c0_i32, %c0_i32_0 : i32, i32
  }
  func.func @transform_8(%arg0: i32) -> (i32, i32) {
    %c0_i32 = arith.constant 0 : i32
    %c0_i32_0 = arith.constant 0 : i32
    %c0_i32_1 = arith.constant 0 : i32
    return %c0_i32, %c0_i32_0 : i32, i32
  }
  func.func @transform_9(%arg0: i32) -> (i32, i32) {
    %c0_i32 = arith.constant 0 : i32
    %c0_i32_0 = arith.constant 0 : i32
    %c0_i32_1 = arith.constant 0 : i32
    return %c0_i32, %c0_i32_0 : i32, i32
  }
  func.func @transform_10(%arg0: i32) -> (i32, i32) {
    %c0_i32 = arith.constant 0 : i32
    %c0_i32_0 = arith.constant 0 : i32
    %c0_i32_1 = arith.constant 0 : i32
    return %c0_i32, %c0_i32_0 : i32, i32
  }
  func.func @transform_11(%arg0: i32) -> (i32, i32) {
    %c0_i32 = arith.constant 0 : i32
    %c0_i32_0 = arith.constant 0 : i32
    return %c0_i32, %arg0 : i32, i32
  }
}

module attributes {stable_mosaic.version = 11 : i64} {
  func.func @_irm_mlp_kernel(%arg0: i32, %arg1: memref<128x32xf32, #tpu.memory_space<vmem>>, %arg2: memref<96x32xbf16, #tpu.memory_space<vmem>>, %arg3: memref<96x1xf32, #tpu.memory_space<vmem>>, %arg4: memref<96x96xbf16, #tpu.memory_space<vmem>>, %arg5: memref<96x1xf32, #tpu.memory_space<vmem>>, %arg6: memref<96x96xbf16, #tpu.memory_space<vmem>>, %arg7: memref<96x1xf32, #tpu.memory_space<vmem>>, %arg8: memref<96x96xbf16, #tpu.memory_space<vmem>>, %arg9: memref<96x1xf32, #tpu.memory_space<vmem>>, %arg10: memref<64x96xbf16, #tpu.memory_space<vmem>>, %arg11: memref<64x1xf32, #tpu.memory_space<vmem>>, %arg12: memref<64x128xf32, #tpu.memory_space<vmem>>) attributes {dimension_semantics = [#tpu.dimension_semantics<parallel>], iteration_bounds = array<i64: 1>, scalar_prefetch = 0 : i64, scratch_operands = 0 : i64, tpu.core_type = #tpu.core_type<tc>, window_params = [{transform_indices = @transform_0, window_bounds = array<i64: 128, 32>}, {pipeline_mode = #tpu.pipeline_mode<synchronous>, transform_indices = @transform_1, window_bounds = array<i64: 96, 32>}, {pipeline_mode = #tpu.pipeline_mode<synchronous>, transform_indices = @transform_2, window_bounds = array<i64: 96, 1>}, {pipeline_mode = #tpu.pipeline_mode<synchronous>, transform_indices = @transform_3, window_bounds = array<i64: 96, 96>}, {pipeline_mode = #tpu.pipeline_mode<synchronous>, transform_indices = @transform_4, window_bounds = array<i64: 96, 1>}, {pipeline_mode = #tpu.pipeline_mode<synchronous>, transform_indices = @transform_5, window_bounds = array<i64: 96, 96>}, {pipeline_mode = #tpu.pipeline_mode<synchronous>, transform_indices = @transform_6, window_bounds = array<i64: 96, 1>}, {pipeline_mode = #tpu.pipeline_mode<synchronous>, transform_indices = @transform_7, window_bounds = array<i64: 96, 96>}, {pipeline_mode = #tpu.pipeline_mode<synchronous>, transform_indices = @transform_8, window_bounds = array<i64: 96, 1>}, {pipeline_mode = #tpu.pipeline_mode<synchronous>, transform_indices = @transform_9, window_bounds = array<i64: 64, 96>}, {pipeline_mode = #tpu.pipeline_mode<synchronous>, transform_indices = @transform_10, window_bounds = array<i64: 64, 1>}, {transform_indices = @transform_11, window_bounds = array<i64: 64, 128>}]} {
    %c0 = arith.constant 0 : index
    %c0_0 = arith.constant 0 : index
    %0 = vector.load %arg2[%c0, %c0_0] : memref<96x32xbf16, #tpu.memory_space<vmem>>, vector<96x32xbf16>
    %c0_1 = arith.constant 0 : index
    %c0_2 = arith.constant 0 : index
    %1 = vector.load %arg1[%c0_1, %c0_2] : memref<128x32xf32, #tpu.memory_space<vmem>>, vector<128x32xf32>
    %2 = arith.truncf %1 : vector<128x32xf32> to vector<128x32xbf16>
    %cst = arith.constant dense<0.000000e+00> : vector<96x128xf32>
    %3 = tpu.matmul %0, %2, %cst {dimension_numbers = #tpu.dot_dimension_numbers<[1], [1], [0], [0], [0, 0, 1, 0], [], []>} : vector<96x32xbf16>, vector<128x32xbf16>, vector<96x128xf32> -> vector<96x128xf32>
    %c0_3 = arith.constant 0 : index
    %c0_4 = arith.constant 0 : index
    %4 = vector.load %arg3[%c0_3, %c0_4] : memref<96x1xf32, #tpu.memory_space<vmem>>, vector<96x1xf32>
    %5 = vector.broadcast %4 : vector<96x1xf32> to vector<96x128xf32>
    %6 = arith.addf %3, %5 : vector<96x128xf32>
    %cst_5 = arith.constant 0.000000e+00 : f32
    %7 = vector.broadcast %cst_5 : f32 to vector<96x128xf32>
    %8 = arith.maximumf %6, %7 : vector<96x128xf32>
    %9 = arith.truncf %8 : vector<96x128xf32> to vector<96x128xbf16>
    %c0_6 = arith.constant 0 : index
    %c0_7 = arith.constant 0 : index
    %10 = vector.load %arg4[%c0_6, %c0_7] : memref<96x96xbf16, #tpu.memory_space<vmem>>, vector<96x96xbf16>
    %cst_8 = arith.constant dense<0.000000e+00> : vector<96x128xf32>
    %11 = tpu.matmul %10, %9, %cst_8 {dimension_numbers = #tpu.dot_dimension_numbers<[1], [0], [0], [1], [0, 0, 1, 1], [], []>} : vector<96x96xbf16>, vector<96x128xbf16>, vector<96x128xf32> -> vector<96x128xf32>
    %c0_9 = arith.constant 0 : index
    %c0_10 = arith.constant 0 : index
    %12 = vector.load %arg5[%c0_9, %c0_10] : memref<96x1xf32, #tpu.memory_space<vmem>>, vector<96x1xf32>
    %13 = vector.broadcast %12 : vector<96x1xf32> to vector<96x128xf32>
    %14 = arith.addf %11, %13 : vector<96x128xf32>
    %cst_11 = arith.constant 0.000000e+00 : f32
    %15 = vector.broadcast %cst_11 : f32 to vector<96x128xf32>
    %16 = arith.maximumf %14, %15 : vector<96x128xf32>
    %17 = arith.truncf %16 : vector<96x128xf32> to vector<96x128xbf16>
    %c0_12 = arith.constant 0 : index
    %c0_13 = arith.constant 0 : index
    %18 = vector.load %arg6[%c0_12, %c0_13] : memref<96x96xbf16, #tpu.memory_space<vmem>>, vector<96x96xbf16>
    %cst_14 = arith.constant dense<0.000000e+00> : vector<96x128xf32>
    %19 = tpu.matmul %18, %17, %cst_14 {dimension_numbers = #tpu.dot_dimension_numbers<[1], [0], [0], [1], [0, 0, 1, 1], [], []>} : vector<96x96xbf16>, vector<96x128xbf16>, vector<96x128xf32> -> vector<96x128xf32>
    %c0_15 = arith.constant 0 : index
    %c0_16 = arith.constant 0 : index
    %20 = vector.load %arg7[%c0_15, %c0_16] : memref<96x1xf32, #tpu.memory_space<vmem>>, vector<96x1xf32>
    %21 = vector.broadcast %20 : vector<96x1xf32> to vector<96x128xf32>
    %22 = arith.addf %19, %21 : vector<96x128xf32>
    %cst_17 = arith.constant 0.000000e+00 : f32
    %23 = vector.broadcast %cst_17 : f32 to vector<96x128xf32>
    %24 = arith.maximumf %22, %23 : vector<96x128xf32>
    %25 = arith.truncf %24 : vector<96x128xf32> to vector<96x128xbf16>
    %c0_18 = arith.constant 0 : index
    %c0_19 = arith.constant 0 : index
    %26 = vector.load %arg8[%c0_18, %c0_19] : memref<96x96xbf16, #tpu.memory_space<vmem>>, vector<96x96xbf16>
    %cst_20 = arith.constant dense<0.000000e+00> : vector<96x128xf32>
    %27 = tpu.matmul %26, %25, %cst_20 {dimension_numbers = #tpu.dot_dimension_numbers<[1], [0], [0], [1], [0, 0, 1, 1], [], []>} : vector<96x96xbf16>, vector<96x128xbf16>, vector<96x128xf32> -> vector<96x128xf32>
    %c0_21 = arith.constant 0 : index
    %c0_22 = arith.constant 0 : index
    %28 = vector.load %arg9[%c0_21, %c0_22] : memref<96x1xf32, #tpu.memory_space<vmem>>, vector<96x1xf32>
    %29 = vector.broadcast %28 : vector<96x1xf32> to vector<96x128xf32>
    %30 = arith.addf %27, %29 : vector<96x128xf32>
    %cst_23 = arith.constant 0.000000e+00 : f32
    %31 = vector.broadcast %cst_23 : f32 to vector<96x128xf32>
    %32 = arith.maximumf %30, %31 : vector<96x128xf32>
    %33 = arith.truncf %32 : vector<96x128xf32> to vector<96x128xbf16>
    %c0_24 = arith.constant 0 : index
    %c0_25 = arith.constant 0 : index
    %34 = vector.load %arg10[%c0_24, %c0_25] : memref<64x96xbf16, #tpu.memory_space<vmem>>, vector<64x96xbf16>
    %cst_26 = arith.constant dense<0.000000e+00> : vector<64x128xf32>
    %35 = tpu.matmul %34, %33, %cst_26 {dimension_numbers = #tpu.dot_dimension_numbers<[1], [0], [0], [1], [0, 0, 1, 1], [], []>} : vector<64x96xbf16>, vector<96x128xbf16>, vector<64x128xf32> -> vector<64x128xf32>
    %c0_27 = arith.constant 0 : index
    %c0_28 = arith.constant 0 : index
    %36 = vector.load %arg11[%c0_27, %c0_28] : memref<64x1xf32, #tpu.memory_space<vmem>>, vector<64x1xf32>
    %37 = vector.broadcast %36 : vector<64x1xf32> to vector<64x128xf32>
    %38 = arith.addf %35, %37 : vector<64x128xf32>
    %c0_29 = arith.constant 0 : index
    %c0_30 = arith.constant 0 : index
    %39 = vector.load %arg12[%c0_29, %c0_30] : memref<64x128xf32, #tpu.memory_space<vmem>>, vector<64x128xf32>
    tpu.vector_store %arg12[%c0_29, %c0_30], %38 {strides = array<i32>} : memref<64x128xf32, #tpu.memory_space<vmem>>, vector<64x128xf32>,
    return
  }
  func.func @transform_0(%arg0: i32) -> (i32, i32) {
    %c0_i32 = arith.constant 0 : i32
    %c0_i32_0 = arith.constant 0 : i32
    return %arg0, %c0_i32 : i32, i32
  }
  func.func @transform_1(%arg0: i32) -> (i32, i32) {
    %c0_i32 = arith.constant 0 : i32
    %c0_i32_0 = arith.constant 0 : i32
    %c0_i32_1 = arith.constant 0 : i32
    return %c0_i32, %c0_i32_0 : i32, i32
  }
  func.func @transform_2(%arg0: i32) -> (i32, i32) {
    %c0_i32 = arith.constant 0 : i32
    %c0_i32_0 = arith.constant 0 : i32
    %c0_i32_1 = arith.constant 0 : i32
    return %c0_i32, %c0_i32_0 : i32, i32
  }
  func.func @transform_3(%arg0: i32) -> (i32, i32) {
    %c0_i32 = arith.constant 0 : i32
    %c0_i32_0 = arith.constant 0 : i32
    %c0_i32_1 = arith.constant 0 : i32
    return %c0_i32, %c0_i32_0 : i32, i32
  }
  func.func @transform_4(%arg0: i32) -> (i32, i32) {
    %c0_i32 = arith.constant 0 : i32
    %c0_i32_0 = arith.constant 0 : i32
    %c0_i32_1 = arith.constant 0 : i32
    return %c0_i32, %c0_i32_0 : i32, i32
  }
  func.func @transform_5(%arg0: i32) -> (i32, i32) {
    %c0_i32 = arith.constant 0 : i32
    %c0_i32_0 = arith.constant 0 : i32
    %c0_i32_1 = arith.constant 0 : i32
    return %c0_i32, %c0_i32_0 : i32, i32
  }
  func.func @transform_6(%arg0: i32) -> (i32, i32) {
    %c0_i32 = arith.constant 0 : i32
    %c0_i32_0 = arith.constant 0 : i32
    %c0_i32_1 = arith.constant 0 : i32
    return %c0_i32, %c0_i32_0 : i32, i32
  }
  func.func @transform_7(%arg0: i32) -> (i32, i32) {
    %c0_i32 = arith.constant 0 : i32
    %c0_i32_0 = arith.constant 0 : i32
    %c0_i32_1 = arith.constant 0 : i32
    return %c0_i32, %c0_i32_0 : i32, i32
  }
  func.func @transform_8(%arg0: i32) -> (i32, i32) {
    %c0_i32 = arith.constant 0 : i32
    %c0_i32_0 = arith.constant 0 : i32
    %c0_i32_1 = arith.constant 0 : i32
    return %c0_i32, %c0_i32_0 : i32, i32
  }
  func.func @transform_9(%arg0: i32) -> (i32, i32) {
    %c0_i32 = arith.constant 0 : i32
    %c0_i32_0 = arith.constant 0 : i32
    %c0_i32_1 = arith.constant 0 : i32
    return %c0_i32, %c0_i32_0 : i32, i32
  }
  func.func @transform_10(%arg0: i32) -> (i32, i32) {
    %c0_i32 = arith.constant 0 : i32
    %c0_i32_0 = arith.constant 0 : i32
    %c0_i32_1 = arith.constant 0 : i32
    return %c0_i32, %c0_i32_0 : i32, i32
  }
  func.func @transform_11(%arg0: i32) -> (i32, i32) {
    %c0_i32 = arith.constant 0 : i32
    %c0_i32_0 = arith.constant 0 : i32
    return %c0_i32, %arg0 : i32, i32
  }
}

</mosaic_0001>

<llo_original>
// kernel: tpu_custom_call.1
$region0: #{tpu_custom_call.1}
  #allocation0 [shape = 'u32[]', space=smem, size = 0x4, offset = 0x4, fixed_abs, tag = 'smem constant byte address 0x4 - core index']
  #allocation1 [shape = 'u32[144,128]{1,0:T(1,128)}', space=vmem, size = 0x12000, scoped, tag = 'internal scratch']
  %s0 = inlined_call_operand.vmem [shape: f32[128,32], index: 0, kind: input, shape index: {}]
  %s1 = inlined_call_operand.vmem [shape: bf16[96,32], index: 1, kind: input, shape index: {}]
  %s2 = inlined_call_operand.vmem [shape: f32[96,1], index: 2, kind: input, shape index: {}]
  %s3 = inlined_call_operand.vmem [shape: bf16[96,96], index: 3, kind: input, shape index: {}]
  %s4 = inlined_call_operand.vmem [shape: f32[96,1], index: 4, kind: input, shape index: {}]
  %s5 = inlined_call_operand.vmem [shape: bf16[96,96], index: 5, kind: input, shape index: {}]
  %s6 = inlined_call_operand.vmem [shape: f32[96,1], index: 6, kind: input, shape index: {}]
  %s7 = inlined_call_operand.vmem [shape: bf16[96,96], index: 7, kind: input, shape index: {}]
  %s8 = inlined_call_operand.vmem [shape: f32[96,1], index: 8, kind: input, shape index: {}]
  %s9 = inlined_call_operand.vmem [shape: bf16[64,96], index: 9, kind: input, shape index: {}]
  %s10 = inlined_call_operand.vmem [shape: f32[64,1], index: 10, kind: input, shape index: {}]
  %s11 = inlined_call_operand.hbm [shape: f32[64,128], index: 11, kind: output, shape index: {}]
  %s12 = sld [smem:[#allocation0]]
  $region54: #{tpu_custom_call.1} parent=0
    _
  %s14 = ssub.s32 1, %s12
  %s15 = scalar_select 0, %s14, %s12
  $region1: #{tpu_custom_call.1} parent=0
    #allocation2 [shape = 'u8[32768]{0}', space=vmem, size = 0x8000, scoped, tag = 'output window, operand 0, single buffered']
    #allocation3 [shape = 's32[1]{0}', space=sflag, size = 0x4, scoped, tag = 'scoped memory for tpu_custom_call.1']
    %16 = vsyncpa [#allocation3], 0
    // Predicated region
    $region2: #{tpu_custom_call.1} parent=1 // pred_check
      _
    $region3: #{tpu_custom_call.1} parent=1 // pred_check_branch
      %18 = sbr.rel (0) target = $region5
    $region4: #{tpu_custom_call.1} parent=1 // pred_region
      _
    $region5: #{tpu_custom_call.1} parent=1 // pred_fallthru
      _
    // Predicated region
    $region6: #{tpu_custom_call.1} parent=1 // pred_check
      _
    $region7: #{tpu_custom_call.1} parent=1 // pred_check_branch
      %20 = sbr.rel (0) target = $region9
    $region8: #{tpu_custom_call.1} parent=1 // pred_region
      _
    $region9: #{tpu_custom_call.1} parent=1 // pred_fallthru
      _
    // Predicated region
    $region10: #{tpu_custom_call.1} parent=1 // pred_check
      _
    $region11: #{tpu_custom_call.1} parent=1 // pred_check_branch
      %22 = sbr.rel (0) target = $region13
    $region12: #{tpu_custom_call.1} parent=1 // pred_region
      _
    $region13: #{tpu_custom_call.1} parent=1 // pred_fallthru
      _
    // Predicated region
    $region14: #{tpu_custom_call.1} parent=1 // pred_check
      _
    $region15: #{tpu_custom_call.1} parent=1 // pred_check_branch
      %24 = sbr.rel (0) target = $region17
    $region16: #{tpu_custom_call.1} parent=1 // pred_region
      _
    $region17: #{tpu_custom_call.1} parent=1 // pred_fallthru
      _
    // Predicated region
    $region18: #{tpu_custom_call.1} parent=1 // pred_check
      _
    $region19: #{tpu_custom_call.1} parent=1 // pred_check_branch
      %26 = sbr.rel (0) target = $region21
    $region20: #{tpu_custom_call.1} parent=1 // pred_region
      _
    $region21: #{tpu_custom_call.1} parent=1 // pred_fallthru
      _
    // Predicated region
    $region22: #{tpu_custom_call.1} parent=1 // pred_check
      _
    $region23: #{tpu_custom_call.1} parent=1 // pred_check_branch
      %28 = sbr.rel (0) target = $region25
    $region24: #{tpu_custom_call.1} parent=1 // pred_region
      _
    $region25: #{tpu_custom_call.1} parent=1 // pred_fallthru
      _
    // Predicated region
    $region26: #{tpu_custom_call.1} parent=1 // pred_check
      _
    $region27: #{tpu_custom_call.1} parent=1 // pred_check_branch
      %30 = sbr.rel (0) target = $region29
    $region28: #{tpu_custom_call.1} parent=1 // pred_region
      _
    $region29: #{tpu_custom_call.1} parent=1 // pred_fallthru
      _
    // Predicated region
    $region30: #{tpu_custom_call.1} parent=1 // pred_check
      _
    $region31: #{tpu_custom_call.1} parent=1 // pred_check_branch
      %32 = sbr.rel (0) target = $region33
    $region32: #{tpu_custom_call.1} parent=1 // pred_region
      _
    $region33: #{tpu_custom_call.1} parent=1 // pred_fallthru
      _
    // Predicated region
    $region34: #{tpu_custom_call.1} parent=1 // pred_check
      _
    $region35: #{tpu_custom_call.1} parent=1 // pred_check_branch
      %34 = sbr.rel (0) target = $region37
    $region36: #{tpu_custom_call.1} parent=1 // pred_region
      _
    $region37: #{tpu_custom_call.1} parent=1 // pred_fallthru
      _
    // Predicated region
    $region38: #{tpu_custom_call.1} parent=1 // pred_check
      _
    $region39: #{tpu_custom_call.1} parent=1 // pred_check_branch
      %36 = sbr.rel (0) target = $region41
    $region40: #{tpu_custom_call.1} parent=1 // pred_region
      _
    $region41: #{tpu_custom_call.1} parent=1 // pred_fallthru
      _
    // Predicated region
    $region42: #{tpu_custom_call.1} parent=1 // pred_check
      _
    $region43: #{tpu_custom_call.1} parent=1 // pred_check_branch
      %38 = sbr.rel (0) target = $region45
    $region44: #{tpu_custom_call.1} parent=1 // pred_region
      _
    $region45: #{tpu_custom_call.1} parent=1 // pred_fallthru
      _
    %v40 = vld [vmem:[%s1] sm:$0xf]
    %v41 = vld [vmem:[%s1 + $0x4] sm:$0xf]
    %v42 = vld [vmem:[%s1 + $0x8] sm:$0xf]
    %v43 = vld [vmem:[%s1 + $0xc] sm:$0xf]
    %v44 = vld [vmem:[%s1 + $0x10] sm:$0xf]
    %v45 = vld [vmem:[%s1 + $0x14] sm:$0xf]
    %v46 = vld [vmem:[%s1 + $0x18] sm:$0xf]
    %v47 = vld [vmem:[%s1 + $0x1c] sm:$0xf]
    %v48 = vld [vmem:[%s1 + $0x20] sm:$0xf]
    %v49 = vld [vmem:[%s1 + $0x24] sm:$0xf]
    %v50 = vld [vmem:[%s1 + $0x28] sm:$0xf]
    %v51 = vld [vmem:[%s1 + $0x2c] sm:$0xf]
    %v52 = vld [vmem:[%s0] sm:$0xff]
    %v53 = vld [vmem:[%s0 + $0x8] sm:$0xff]
    %v54 = vld [vmem:[%s0 + $0x10] sm:$0xff]
    %v55 = vld [vmem:[%s0 + $0x18] sm:$0xff]
    %v56 = vld [vmem:[%s0 + $0x20] sm:$0xff]
    %v57 = vld [vmem:[%s0 + $0x28] sm:$0xff]
    %v58 = vld [vmem:[%s0 + $0x30] sm:$0xff]
    %v59 = vld [vmem:[%s0 + $0x38] sm:$0xff]
    %v60 = vld [vmem:[%s0 + $0x40] sm:$0xff]
    %v61 = vld [vmem:[%s0 + $0x48] sm:$0xff]
    %v62 = vld [vmem:[%s0 + $0x50] sm:$0xff]
    %v63 = vld [vmem:[%s0 + $0x58] sm:$0xff]
    %v64 = vld [vmem:[%s0 + $0x60] sm:$0xff]
    %v65 = vld [vmem:[%s0 + $0x68] sm:$0xff]
    %v66 = vld [vmem:[%s0 + $0x70] sm:$0xff]
    %v67 = vld [vmem:[%s0 + $0x78] sm:$0xff]
    %v68 = vpack.c.bf16 %v53, %v52
    %v69 = vpack.c.bf16 %v55, %v54
    %v70 = vpack.c.bf16 %v57, %v56
    %v71 = vpack.c.bf16 %v59, %v58
    %v72 = vpack.c.bf16 %v61, %v60
    %v73 = vpack.c.bf16 %v63, %v62
    %v74 = vpack.c.bf16 %v65, %v64
    %v75 = vpack.c.bf16 %v67, %v66
    %v76 = vld [vmem:[%s2] sm:$0xff]
    %v77 = vld [vmem:[%s2 + $0x8] sm:$0xff]
    %v78 = vld [vmem:[%s2 + $0x10] sm:$0xff]
    %v79 = vld [vmem:[%s2 + $0x18] sm:$0xff]
    %v80 = vld [vmem:[%s2 + $0x20] sm:$0xff]
    %v81 = vld [vmem:[%s2 + $0x28] sm:$0xff]
    %v82 = vld [vmem:[%s2 + $0x30] sm:$0xff]
    %v83 = vld [vmem:[%s2 + $0x38] sm:$0xff]
    %v84 = vld [vmem:[%s2 + $0x40] sm:$0xff]
    %v85 = vld [vmem:[%s2 + $0x48] sm:$0xff]
    %v86 = vld [vmem:[%s2 + $0x50] sm:$0xff]
    %v87 = vld [vmem:[%s2 + $0x58] sm:$0xff]
    %89 = vset.pattern.permute.xlu0 0
    %90 = vperm.xlu0 %89, %v76
    %v91 = vpop.permute.xlu0 %90
    %94 = vset.pattern.permute.xlu0 0
    %95 = vperm.xlu0 %94, %v77
    %v96 = vpop.permute.xlu0 %95
    %99 = vset.pattern.permute.xlu0 0
    %100 = vperm.xlu0 %99, %v78
    %v101 = vpop.permute.xlu0 %100
    %104 = vset.pattern.permute.xlu0 0
    %105 = vperm.xlu0 %104, %v79
    %v106 = vpop.permute.xlu0 %105
    %109 = vset.pattern.permute.xlu0 0
    %110 = vperm.xlu0 %109, %v80
    %v111 = vpop.permute.xlu0 %110
    %114 = vset.pattern.permute.xlu0 0
    %115 = vperm.xlu0 %114, %v81
    %v116 = vpop.permute.xlu0 %115
    %119 = vset.pattern.permute.xlu0 0
    %120 = vperm.xlu0 %119, %v82
    %v121 = vpop.permute.xlu0 %120
    %124 = vset.pattern.permute.xlu0 0
    %125 = vperm.xlu0 %124, %v83
    %v126 = vpop.permute.xlu0 %125
    %129 = vset.pattern.permute.xlu0 0
    %130 = vperm.xlu0 %129, %v84
    %v131 = vpop.permute.xlu0 %130
    %134 = vset.pattern.permute.xlu0 0
    %135 = vperm.xlu0 %134, %v85
    %v136 = vpop.permute.xlu0 %135
    %139 = vset.pattern.permute.xlu0 0
    %140 = vperm.xlu0 %139, %v86
    %v141 = vpop.permute.xlu0 %140
    %144 = vset.pattern.permute.xlu0 0
    %145 = vperm.xlu0 %144, %v87
    %v146 = vpop.permute.xlu0 %145
    %v160 = vunpack.c.l.b16 %v40
    %v161 = vunpack.c.l.b16 %v41
    %v162 = vunpack.c.l.b16 %v42
    %v163 = vunpack.c.l.b16 %v43
    %v164 = vunpack.c.l.b16 %v44
    %v165 = vunpack.c.l.b16 %v45
    %v166 = vunpack.c.l.b16 %v46
    %v167 = vunpack.c.l.b16 %v47
    %v168 = vunpack.c.l.b16 %v48
    %v169 = vunpack.c.l.b16 %v49
    %v170 = vunpack.c.l.b16 %v50
    %v171 = vunpack.c.l.b16 %v51
    %v172 = vpack.c.b16 %v161, %v160
    %v173 = vpack.c.b16 %v163, %v162
    %v174 = vpack.c.b16 %v165, %v164
    %v175 = vpack.c.b16 %v167, %v166
    %v176 = vpack.c.b16 %v169, %v168
    %v177 = vpack.c.b16 %v171, %v170
    %vm178 = vcmask 261120
    %v180 = vsel %vm178, %v172, 0
    %v183 = vsel %vm178, %v173, 0
    %v186 = vsel %vm178, %v174, 0
    %v189 = vsel %vm178, %v175, 0
    %v192 = vsel %vm178, %v176, 0
    %v195 = vsel %vm178, %v177, 0
    %v198 = vsel %vm178, %v68, 0
    %v201 = vsel %vm178, %v69, 0
    %v204 = vsel %vm178, %v70, 0
    %v207 = vsel %vm178, %v71, 0
    %v210 = vsel %vm178, %v72, 0
    %v213 = vsel %vm178, %v73, 0
    %v216 = vsel %vm178, %v74, 0
    %v219 = vsel %vm178, %v75, 0
    %221 = vmatprep.subr.bf16.mxu0 0
    %222 = vmatpush1.bf16.xpose.msra.mxu0 %v198
    %223 = vmatprep.subr.bf16.mxu0 0
    %224 = vmatpush1.bf16.xpose.msra.mxu0 %v201
    %225 = vmatprep.subr.bf16.mxu0 0
    %226 = vmatpush1.bf16.xpose.msra.mxu0 %v204
    %227 = vmatprep.subr.bf16.mxu0 0
    %228 = vmatpush1.bf16.xpose.msra.mxu0 %v207
    %229 = vmatprep.subr.bf16.mxu0 0
    %230 = vmatpush1.bf16.xpose.msra.mxu0 %v210
    %231 = vmatprep.subr.bf16.mxu0 0
    %232 = vmatpush1.bf16.xpose.msra.mxu0 %v213
    %233 = vmatprep.subr.bf16.mxu0 0
    %234 = vmatpush1.bf16.xpose.msra.mxu0 %v216
    %235 = vmatprep.subr.bf16.mxu0 0
    %236 = vmatpush1.bf16.xpose.msra.mxu0 %v219
    %237 = vmatprep.subr.bf16.mxu0 0
    %238 = vmatpush1.bf16.xpose.msra.mxu0 0
    %239 = vmatprep.subr.bf16.mxu0 0
    %240 = vmatpush1.bf16.xpose.msra.mxu0 0
    %241 = vmatprep.subr.bf16.mxu0 0
    %242 = vmatpush1.bf16.xpose.msra.mxu0 0
    %243 = vmatprep.subr.bf16.mxu0 0
    %244 = vmatpush1.bf16.xpose.msra.mxu0 0
    %245 = vmatprep.subr.bf16.mxu0 0
    %246 = vmatpush1.bf16.xpose.msra.mxu0 0
    %247 = vmatprep.subr.bf16.mxu0 0
    %248 = vmatpush1.bf16.xpose.msra.mxu0 0
    %249 = vmatprep.subr.bf16.mxu0 0
    %250 = vmatpush1.bf16.xpose.msra.mxu0 0
    %251 = vmatprep.subr.bf16.mxu0 0
    %252 = vmatpush1.bf16.xpose.msra.mxu0 0
    %253 = vmatprep.mubr.bf16.mxu0 0
    %254 = vmatmul.mubr.bf16.gmra.mrb[0].mxu0 %v180
    %v255 = vpop.f32.mrb[0].mxu0
    %v256 = vadd.f32 %v91, %v255
    %v257 = vpop.f32.mrb[0].mxu0
    %v258 = vpop.f32.mrb[0].mxu0
    %v259 = vadd.f32 %v96, %v258
    %v260 = vpop.f32.mrb[0].mxu0
    %261 = vmatprep.mubr.bf16.mxu0 0
    %262 = vmatmul.mubr.bf16.gmra.mrb[0].mxu0 %v183
    %v263 = vpop.f32.mrb[0].mxu0
    %v264 = vadd.f32 %v101, %v263
    %v265 = vpop.f32.mrb[0].mxu0
    %v266 = vpop.f32.mrb[0].mxu0
    %v267 = vadd.f32 %v106, %v266
    %v268 = vpop.f32.mrb[0].mxu0
    %269 = vmatprep.mubr.bf16.mxu0 0
    %270 = vmatmul.mubr.bf16.gmra.mrb[0].mxu0 %v186
    %v271 = vpop.f32.mrb[0].mxu0
    %v272 = vadd.f32 %v111, %v271
    %v273 = vpop.f32.mrb[0].mxu0
    %v274 = vpop.f32.mrb[0].mxu0
    %v275 = vadd.f32 %v116, %v274
    %v276 = vpop.f32.mrb[0].mxu0
    %277 = vmatprep.mubr.bf16.mxu0 0
    %278 = vmatmul.mubr.bf16.gmra.mrb[0].mxu0 %v189
    %v279 = vpop.f32.mrb[0].mxu0
    %v280 = vadd.f32 %v121, %v279
    %v281 = vpop.f32.mrb[0].mxu0
    %v282 = vpop.f32.mrb[0].mxu0
    %v283 = vadd.f32 %v126, %v282
    %v284 = vpop.f32.mrb[0].mxu0
    %285 = vmatprep.mubr.bf16.mxu0 0
    %286 = vmatmul.mubr.bf16.gmra.mrb[0].mxu0 %v192
    %v287 = vpop.f32.mrb[0].mxu0
    %v288 = vadd.f32 %v131, %v287
    %v289 = vpop.f32.mrb[0].mxu0
    %v290 = vpop.f32.mrb[0].mxu0
    %v291 = vadd.f32 %v136, %v290
    %v292 = vpop.f32.mrb[0].mxu0
    %293 = vmatprep.mubr.bf16.mxu0 0
    %294 = vmatmul.mubr.bf16.gmra.mrb[0].mxu0 %v195
    %v295 = vpop.f32.mrb[0].mxu0
    %v296 = vadd.f32 %v141, %v295
    %v297 = vpop.f32.mrb[0].mxu0
    %v298 = vpop.f32.mrb[0].mxu0
    %v299 = vadd.f32 %v146, %v298
    %v300 = vpop.f32.mrb[0].mxu0
    %301 = vdwg.mxu0
    %v302 = vmax.f32 %v256, 0.0
    %v303 = vmax.f32 %v259, 0.0
    %v304 = vmax.f32 %v264, 0.0
    %v305 = vmax.f32 %v267, 0.0
    %v306 = vmax.f32 %v272, 0.0
    %v307 = vmax.f32 %v275, 0.0
    %v308 = vmax.f32 %v280, 0.0
    %v309 = vmax.f32 %v283, 0.0
    %v310 = vmax.f32 %v288, 0.0
    %v311 = vmax.f32 %v291, 0.0
    %v312 = vmax.f32 %v296, 0.0
    %v313 = vmax.f32 %v299, 0.0
    %v314 = vpack.c.bf16 %v303, %v302
    %v315 = vpack.c.bf16 %v305, %v304
    %v316 = vpack.c.bf16 %v307, %v306
    %v317 = vpack.c.bf16 %v309, %v308
    %v318 = vpack.c.bf16 %v311, %v310
    %v319 = vpack.c.bf16 %v313, %v312
    %v320 = vld [vmem:[%s3] sm:$0xf]
    %v321 = vld [vmem:[%s3 + $0x4] sm:$0xf]
    %v322 = vld [vmem:[%s3 + $0x8] sm:$0xf]
    %v323 = vld [vmem:[%s3 + $0xc] sm:$0xf]
    %v324 = vld [vmem:[%s3 + $0x10] sm:$0xf]
    %v325 = vld [vmem:[%s3 + $0x14] sm:$0xf]
    %v326 = vld [vmem:[%s3 + $0x18] sm:$0xf]
    %v327 = vld [vmem:[%s3 + $0x1c] sm:$0xf]
    %v328 = vld [vmem:[%s3 + $0x20] sm:$0xf]
    %v329 = vld [vmem:[%s3 + $0x24] sm:$0xf]
    %v330 = vld [vmem:[%s3 + $0x28] sm:$0xf]
    %v331 = vld [vmem:[%s3 + $0x2c] sm:$0xf]
    %v332 = vld [vmem:[%s4] sm:$0xff]
    %v333 = vld [vmem:[%s4 + $0x8] sm:$0xff]
    %v334 = vld [vmem:[%s4 + $0x10] sm:$0xff]
    %v335 = vld [vmem:[%s4 + $0x18] sm:$0xff]
    %v336 = vld [vmem:[%s4 + $0x20] sm:$0xff]
    %v337 = vld [vmem:[%s4 + $0x28] sm:$0xff]
    %v338 = vld [vmem:[%s4 + $0x30] sm:$0xff]
    %v339 = vld [vmem:[%s4 + $0x38] sm:$0xff]
    %v340 = vld [vmem:[%s4 + $0x40] sm:$0xff]
    %v341 = vld [vmem:[%s4 + $0x48] sm:$0xff]
    %v342 = vld [vmem:[%s4 + $0x50] sm:$0xff]
    %v343 = vld [vmem:[%s4 + $0x58] sm:$0xff]
    %345 = vset.pattern.permute.xlu0 0
    %346 = vperm.xlu0 %345, %v332
    %v347 = vpop.permute.xlu0 %346
    %350 = vset.pattern.permute.xlu0 0
    %351 = vperm.xlu0 %350, %v333
    %v352 = vpop.permute.xlu0 %351
    %355 = vset.pattern.permute.xlu0 0
    %356 = vperm.xlu0 %355, %v334
    %v357 = vpop.permute.xlu0 %356
    %360 = vset.pattern.permute.xlu0 0
    %361 = vperm.xlu0 %360, %v335
    %v362 = vpop.permute.xlu0 %361
    %365 = vset.pattern.permute.xlu0 0
    %366 = vperm.xlu0 %365, %v336
    %v367 = vpop.permute.xlu0 %366
    %370 = vset.pattern.permute.xlu0 0
    %371 = vperm.xlu0 %370, %v337
    %v372 = vpop.permute.xlu0 %371
    %375 = vset.pattern.permute.xlu0 0
    %376 = vperm.xlu0 %375, %v338
    %v377 = vpop.permute.xlu0 %376
    %380 = vset.pattern.permute.xlu0 0
    %381 = vperm.xlu0 %380, %v339
    %v382 = vpop.permute.xlu0 %381
    %385 = vset.pattern.permute.xlu0 0
    %386 = vperm.xlu0 %385, %v340
    %v387 = vpop.permute.xlu0 %386
    %390 = vset.pattern.permute.xlu0 0
    %391 = vperm.xlu0 %390, %v341
    %v392 = vpop.permute.xlu0 %391
    %395 = vset.pattern.permute.xlu0 0
    %396 = vperm.xlu0 %395, %v342
    %v397 = vpop.permute.xlu0 %396
    %400 = vset.pattern.permute.xlu0 0
    %401 = vperm.xlu0 %400, %v343
    %v402 = vpop.permute.xlu0 %401
    %v416 = vunpack.c.l.b16 %v320
    %v417 = vunpack.c.l.b16 %v321
    %v418 = vunpack.c.l.b16 %v322
    %v419 = vunpack.c.l.b16 %v323
    %v420 = vunpack.c.l.b16 %v324
    %v421 = vunpack.c.l.b16 %v325
    %v422 = vunpack.c.l.b16 %v326
    %v423 = vunpack.c.l.b16 %v327
    %v424 = vunpack.c.l.b16 %v328
    %v425 = vunpack.c.l.b16 %v329
    %v426 = vunpack.c.l.b16 %v330
    %v427 = vunpack.c.l.b16 %v331
    %v428 = vpack.c.b16 %v417, %v416
    %v429 = vpack.c.b16 %v419, %v418
    %v430 = vpack.c.b16 %v421, %v420
    %v431 = vpack.c.b16 %v423, %v422
    %v432 = vpack.c.b16 %v425, %v424
    %v433 = vpack.c.b16 %v427, %v426
    %vm434 = vcmask 785408
    %v436 = vsel %vm434, %v428, 0
    %v439 = vsel %vm434, %v429, 0
    %v442 = vsel %vm434, %v430, 0
    %v445 = vsel %vm434, %v431, 0
    %v448 = vsel %vm434, %v432, 0
    %v451 = vsel %vm434, %v433, 0
    %453 = vmatprep.subr.bf16.mxu0 0
    %454 = vmatpush1.bf16.msra.mxu0 %v314
    %455 = vmatprep.subr.bf16.mxu0 0
    %456 = vmatpush1.bf16.msra.mxu0 %v315
    %457 = vmatprep.subr.bf16.mxu0 0
    %458 = vmatpush1.bf16.msra.mxu0 %v316
    %459 = vmatprep.subr.bf16.mxu0 0
    %460 = vmatpush1.bf16.msra.mxu0 %v317
    %461 = vmatprep.subr.bf16.mxu0 0
    %462 = vmatpush1.bf16.msra.mxu0 %v318
    %463 = vmatprep.subr.bf16.mxu0 0
    %464 = vmatpush1.bf16.msra.mxu0 %v319
    %465 = vmatprep.subr.bf16.mxu0 0
    %466 = vmatpush1.bf16.msra.mxu0 0
    %467 = vmatprep.subr.bf16.mxu0 0
    %468 = vmatpush1.bf16.msra.mxu0 0
    %469 = vmatprep.subr.bf16.mxu0 0
    %470 = vmatpush1.bf16.msra.mxu0 0
    %471 = vmatprep.subr.bf16.mxu0 0
    %472 = vmatpush1.bf16.msra.mxu0 0
    %473 = vmatprep.subr.bf16.mxu0 0
    %474 = vmatpush1.bf16.msra.mxu0 0
    %475 = vmatprep.subr.bf16.mxu0 0
    %476 = vmatpush1.bf16.msra.mxu0 0
    %477 = vmatprep.subr.bf16.mxu0 0
    %478 = vmatpush1.bf16.msra.mxu0 0
    %479 = vmatprep.subr.bf16.mxu0 0
    %480 = vmatpush1.bf16.msra.mxu0 0
    %481 = vmatprep.subr.bf16.mxu0 0
    %482 = vmatpush1.bf16.msra.mxu0 0
    %483 = vmatprep.subr.bf16.mxu0 0
    %484 = vmatpush1.bf16.msra.mxu0 0
    %485 = vmatprep.mubr.bf16.mxu0 0
    %486 = vmatmul.mubr.bf16.gmra.mrb[0].mxu0 %v436
    %v487 = vpop.f32.mrb[0].mxu0
    %v488 = vadd.f32 %v347, %v487
    %v489 = vpop.f32.mrb[0].mxu0
    %v490 = vpop.f32.mrb[0].mxu0
    %v491 = vadd.f32 %v352, %v490
    %v492 = vpop.f32.mrb[0].mxu0
    %493 = vmatprep.mubr.bf16.mxu0 0
    %494 = vmatmul.mubr.bf16.gmra.mrb[0].mxu0 %v439
    %v495 = vpop.f32.mrb[0].mxu0
    %v496 = vadd.f32 %v357, %v495
    %v497 = vpop.f32.mrb[0].mxu0
    %v498 = vpop.f32.mrb[0].mxu0
    %v499 = vadd.f32 %v362, %v498
    %v500 = vpop.f32.mrb[0].mxu0
    %501 = vmatprep.mubr.bf16.mxu0 0
    %502 = vmatmul.mubr.bf16.gmra.mrb[0].mxu0 %v442
    %v503 = vpop.f32.mrb[0].mxu0
    %v504 = vadd.f32 %v367, %v503
    %v505 = vpop.f32.mrb[0].mxu0
    %v506 = vpop.f32.mrb[0].mxu0
    %v507 = vadd.f32 %v372, %v506
    %v508 = vpop.f32.mrb[0].mxu0
    %509 = vmatprep.mubr.bf16.mxu0 0
    %510 = vmatmul.mubr.bf16.gmra.mrb[0].mxu0 %v445
    %v511 = vpop.f32.mrb[0].mxu0
    %v512 = vadd.f32 %v377, %v511
    %v513 = vpop.f32.mrb[0].mxu0
    %v514 = vpop.f32.mrb[0].mxu0
    %v515 = vadd.f32 %v382, %v514
    %v516 = vpop.f32.mrb[0].mxu0
    %517 = vmatprep.mubr.bf16.mxu0 0
    %518 = vmatmul.mubr.bf16.gmra.mrb[0].mxu0 %v448
    %v519 = vpop.f32.mrb[0].mxu0
    %v520 = vadd.f32 %v387, %v519
    %v521 = vpop.f32.mrb[0].mxu0
    %v522 = vpop.f32.mrb[0].mxu0
    %v523 = vadd.f32 %v392, %v522
    %v524 = vpop.f32.mrb[0].mxu0
    %525 = vmatprep.mubr.bf16.mxu0 0
    %526 = vmatmul.mubr.bf16.gmra.mrb[0].mxu0 %v451
    %v527 = vpop.f32.mrb[0].mxu0
    %v528 = vadd.f32 %v397, %v527
    %v529 = vpop.f32.mrb[0].mxu0
    %v530 = vpop.f32.mrb[0].mxu0
    %v531 = vadd.f32 %v402, %v530
    %v532 = vpop.f32.mrb[0].mxu0
    %533 = vdwg.mxu0
    %v534 = vmax.f32 %v488, 0.0
    %v535 = vmax.f32 %v491, 0.0
    %v536 = vmax.f32 %v496, 0.0
    %v537 = vmax.f32 %v499, 0.0
    %v538 = vmax.f32 %v504, 0.0
    %v539 = vmax.f32 %v507, 0.0
    %v540 = vmax.f32 %v512, 0.0
    %v541 = vmax.f32 %v515, 0.0
    %v542 = vmax.f32 %v520, 0.0
    %v543 = vmax.f32 %v523, 0.0
    %v544 = vmax.f32 %v528, 0.0
    %v545 = vmax.f32 %v531, 0.0
    %v546 = vpack.c.bf16 %v535, %v534
    %v547 = vpack.c.bf16 %v537, %v536
    %v548 = vpack.c.bf16 %v539, %v538
    %v549 = vpack.c.bf16 %v541, %v540
    %v550 = vpack.c.bf16 %v543, %v542
    %v551 = vpack.c.bf16 %v545, %v544
    %v552 = vld [vmem:[%s5] sm:$0xf]
    %v553 = vld [vmem:[%s5 + $0x4] sm:$0xf]
    %v554 = vld [vmem:[%s5 + $0x8] sm:$0xf]
    %v555 = vld [vmem:[%s5 + $0xc] sm:$0xf]
    %v556 = vld [vmem:[%s5 + $0x10] sm:$0xf]
    %v557 = vld [vmem:[%s5 + $0x14] sm:$0xf]
    %v558 = vld [vmem:[%s5 + $0x18] sm:$0xf]
    %v559 = vld [vmem:[%s5 + $0x1c] sm:$0xf]
    %v560 = vld [vmem:[%s5 + $0x20] sm:$0xf]
    %v561 = vld [vmem:[%s5 + $0x24] sm:$0xf]
    %v562 = vld [vmem:[%s5 + $0x28] sm:$0xf]
    %v563 = vld [vmem:[%s5 + $0x2c] sm:$0xf]
    %v564 = vld [vmem:[%s6] sm:$0xff]
    %v565 = vld [vmem:[%s6 + $0x8] sm:$0xff]
    %v566 = vld [vmem:[%s6 + $0x10] sm:$0xff]
    %v567 = vld [vmem:[%s6 + $0x18] sm:$0xff]
    %v568 = vld [vmem:[%s6 + $0x20] sm:$0xff]
    %v569 = vld [vmem:[%s6 + $0x28] sm:$0xff]
    %v570 = vld [vmem:[%s6 + $0x30] sm:$0xff]
    %v571 = vld [vmem:[%s6 + $0x38] sm:$0xff]
    %v572 = vld [vmem:[%s6 + $0x40] sm:$0xff]
    %v573 = vld [vmem:[%s6 + $0x48] sm:$0xff]
    %v574 = vld [vmem:[%s6 + $0x50] sm:$0xff]
    %v575 = vld [vmem:[%s6 + $0x58] sm:$0xff]
    %577 = vset.pattern.permute.xlu0 0
    %578 = vperm.xlu0 %577, %v564
    %v579 = vpop.permute.xlu0 %578
    %582 = vset.pattern.permute.xlu0 0
    %583 = vperm.xlu0 %582, %v565
    %v584 = vpop.permute.xlu0 %583
    %587 = vset.pattern.permute.xlu0 0
    %588 = vperm.xlu0 %587, %v566
    %v589 = vpop.permute.xlu0 %588
    %592 = vset.pattern.permute.xlu0 0
    %593 = vperm.xlu0 %592, %v567
    %v594 = vpop.permute.xlu0 %593
    %597 = vset.pattern.permute.xlu0 0
    %598 = vperm.xlu0 %597, %v568
    %v599 = vpop.permute.xlu0 %598
    %602 = vset.pattern.permute.xlu0 0
    %603 = vperm.xlu0 %602, %v569
    %v604 = vpop.permute.xlu0 %603
    %607 = vset.pattern.permute.xlu0 0
    %608 = vperm.xlu0 %607, %v570
    %v609 = vpop.permute.xlu0 %608
    %612 = vset.pattern.permute.xlu0 0
    %613 = vperm.xlu0 %612, %v571
    %v614 = vpop.permute.xlu0 %613
    %617 = vset.pattern.permute.xlu0 0
    %618 = vperm.xlu0 %617, %v572
    %v619 = vpop.permute.xlu0 %618
    %622 = vset.pattern.permute.xlu0 0
    %623 = vperm.xlu0 %622, %v573
    %v624 = vpop.permute.xlu0 %623
    %627 = vset.pattern.permute.xlu0 0
    %628 = vperm.xlu0 %627, %v574
    %v629 = vpop.permute.xlu0 %628
    %632 = vset.pattern.permute.xlu0 0
    %633 = vperm.xlu0 %632, %v575
    %v634 = vpop.permute.xlu0 %633
    %v648 = vunpack.c.l.b16 %v552
    %v649 = vunpack.c.l.b16 %v553
    %v650 = vunpack.c.l.b16 %v554
    %v651 = vunpack.c.l.b16 %v555
    %v652 = vunpack.c.l.b16 %v556
    %v653 = vunpack.c.l.b16 %v557
    %v654 = vunpack.c.l.b16 %v558
    %v655 = vunpack.c.l.b16 %v559
    %v656 = vunpack.c.l.b16 %v560
    %v657 = vunpack.c.l.b16 %v561
    %v658 = vunpack.c.l.b16 %v562
    %v659 = vunpack.c.l.b16 %v563
    %v660 = vpack.c.b16 %v649, %v648
    %v661 = vpack.c.b16 %v651, %v650
    %v662 = vpack.c.b16 %v653, %v652
    %v663 = vpack.c.b16 %v655, %v654
    %v664 = vpack.c.b16 %v657, %v656
    %v665 = vpack.c.b16 %v659, %v658
    %v667 = vsel %vm434, %v660, 0
    %v670 = vsel %vm434, %v661, 0
    %v673 = vsel %vm434, %v662, 0
    %v676 = vsel %vm434, %v663, 0
    %v679 = vsel %vm434, %v664, 0
    %v682 = vsel %vm434, %v665, 0
    %684 = vmatprep.subr.bf16.mxu0 0
    %685 = vmatpush1.bf16.msra.mxu0 %v546
    %686 = vmatprep.subr.bf16.mxu0 0
    %687 = vmatpush1.bf16.msra.mxu0 %v547
    %688 = vmatprep.subr.bf16.mxu0 0
    %689 = vmatpush1.bf16.msra.mxu0 %v548
    %690 = vmatprep.subr.bf16.mxu0 0
    %691 = vmatpush1.bf16.msra.mxu0 %v549
    %692 = vmatprep.subr.bf16.mxu0 0
    %693 = vmatpush1.bf16.msra.mxu0 %v550
    %694 = vmatprep.subr.bf16.mxu0 0
    %695 = vmatpush1.bf16.msra.mxu0 %v551
    %696 = vmatprep.subr.bf16.mxu0 0
    %697 = vmatpush1.bf16.msra.mxu0 0
    %698 = vmatprep.subr.bf16.mxu0 0
    %699 = vmatpush1.bf16.msra.mxu0 0
    %700 = vmatprep.subr.bf16.mxu0 0
    %701 = vmatpush1.bf16.msra.mxu0 0
    %702 = vmatprep.subr.bf16.mxu0 0
    %703 = vmatpush1.bf16.msra.mxu0 0
    %704 = vmatprep.subr.bf16.mxu0 0
    %705 = vmatpush1.bf16.msra.mxu0 0
    %706 = vmatprep.subr.bf16.mxu0 0
    %707 = vmatpush1.bf16.msra.mxu0 0
    %708 = vmatprep.subr.bf16.mxu0 0
    %709 = vmatpush1.bf16.msra.mxu0 0
    %710 = vmatprep.subr.bf16.mxu0 0
    %711 = vmatpush1.bf16.msra.mxu0 0
    %712 = vmatprep.subr.bf16.mxu0 0
    %713 = vmatpush1.bf16.msra.mxu0 0
    %714 = vmatprep.subr.bf16.mxu0 0
    %715 = vmatpush1.bf16.msra.mxu0 0
    %716 = vmatprep.mubr.bf16.mxu0 0
    %717 = vmatmul.mubr.bf16.gmra.mrb[0].mxu0 %v667
    %v718 = vpop.f32.mrb[0].mxu0
    %v719 = vadd.f32 %v579, %v718
    %v720 = vpop.f32.mrb[0].mxu0
    %v721 = vpop.f32.mrb[0].mxu0
    %v722 = vadd.f32 %v584, %v721
    %v723 = vpop.f32.mrb[0].mxu0
    %724 = vmatprep.mubr.bf16.mxu0 0
    %725 = vmatmul.mubr.bf16.gmra.mrb[0].mxu0 %v670
    %v726 = vpop.f32.mrb[0].mxu0
    %v727 = vadd.f32 %v589, %v726
    %v728 = vpop.f32.mrb[0].mxu0
    %v729 = vpop.f32.mrb[0].mxu0
    %v730 = vadd.f32 %v594, %v729
    %v731 = vpop.f32.mrb[0].mxu0
    %732 = vmatprep.mubr.bf16.mxu0 0
    %733 = vmatmul.mubr.bf16.gmra.mrb[0].mxu0 %v673
    %v734 = vpop.f32.mrb[0].mxu0
    %v735 = vadd.f32 %v599, %v734
    %v736 = vpop.f32.mrb[0].mxu0
    %v737 = vpop.f32.mrb[0].mxu0
    %v738 = vadd.f32 %v604, %v737
    %v739 = vpop.f32.mrb[0].mxu0
    %740 = vmatprep.mubr.bf16.mxu0 0
    %741 = vmatmul.mubr.bf16.gmra.mrb[0].mxu0 %v676
    %v742 = vpop.f32.mrb[0].mxu0
    %v743 = vadd.f32 %v609, %v742
    %v744 = vpop.f32.mrb[0].mxu0
    %v745 = vpop.f32.mrb[0].mxu0
    %v746 = vadd.f32 %v614, %v745
    %v747 = vpop.f32.mrb[0].mxu0
    %748 = vmatprep.mubr.bf16.mxu0 0
    %749 = vmatmul.mubr.bf16.gmra.mrb[0].mxu0 %v679
    %v750 = vpop.f32.mrb[0].mxu0
    %v751 = vadd.f32 %v619, %v750
    %v752 = vpop.f32.mrb[0].mxu0
    %v753 = vpop.f32.mrb[0].mxu0
    %v754 = vadd.f32 %v624, %v753
    %v755 = vpop.f32.mrb[0].mxu0
    %756 = vmatprep.mubr.bf16.mxu0 0
    %757 = vmatmul.mubr.bf16.gmra.mrb[0].mxu0 %v682
    %v758 = vpop.f32.mrb[0].mxu0
    %v759 = vadd.f32 %v629, %v758
    %v760 = vpop.f32.mrb[0].mxu0
    %v761 = vpop.f32.mrb[0].mxu0
    %v762 = vadd.f32 %v634, %v761
    %v763 = vpop.f32.mrb[0].mxu0
    %764 = vdwg.mxu0
    %v765 = vmax.f32 %v719, 0.0
    %v766 = vmax.f32 %v722, 0.0
    %v767 = vmax.f32 %v727, 0.0
    %v768 = vmax.f32 %v730, 0.0
    %v769 = vmax.f32 %v735, 0.0
    %v770 = vmax.f32 %v738, 0.0
    %v771 = vmax.f32 %v743, 0.0
    %v772 = vmax.f32 %v746, 0.0
    %v773 = vmax.f32 %v751, 0.0
    %v774 = vmax.f32 %v754, 0.0
    %v775 = vmax.f32 %v759, 0.0
    %v776 = vmax.f32 %v762, 0.0
    %v777 = vpack.c.bf16 %v766, %v765
    %v778 = vpack.c.bf16 %v768, %v767
    %v779 = vpack.c.bf16 %v770, %v769
    %v780 = vpack.c.bf16 %v772, %v771
    %v781 = vpack.c.bf16 %v774, %v773
    %v782 = vpack.c.bf16 %v776, %v775
    %v783 = vld [vmem:[%s7] sm:$0xf]
    %v784 = vld [vmem:[%s7 + $0x4] sm:$0xf]
    %v785 = vld [vmem:[%s7 + $0x8] sm:$0xf]
    %v786 = vld [vmem:[%s7 + $0xc] sm:$0xf]
    %v787 = vld [vmem:[%s7 + $0x10] sm:$0xf]
    %v788 = vld [vmem:[%s7 + $0x14] sm:$0xf]
    %v789 = vld [vmem:[%s7 + $0x18] sm:$0xf]
    %v790 = vld [vmem:[%s7 + $0x1c] sm:$0xf]
    %v791 = vld [vmem:[%s7 + $0x20] sm:$0xf]
    %v792 = vld [vmem:[%s7 + $0x24] sm:$0xf]
    %v793 = vld [vmem:[%s7 + $0x28] sm:$0xf]
    %v794 = vld [vmem:[%s7 + $0x2c] sm:$0xf]
    %v795 = vld [vmem:[%s8] sm:$0xff]
    %v796 = vld [vmem:[%s8 + $0x8] sm:$0xff]
    %v797 = vld [vmem:[%s8 + $0x10] sm:$0xff]
    %v798 = vld [vmem:[%s8 + $0x18] sm:$0xff]
    %v799 = vld [vmem:[%s8 + $0x20] sm:$0xff]
    %v800 = vld [vmem:[%s8 + $0x28] sm:$0xff]
    %v801 = vld [vmem:[%s8 + $0x30] sm:$0xff]
    %v802 = vld [vmem:[%s8 + $0x38] sm:$0xff]
    %v803 = vld [vmem:[%s8 + $0x40] sm:$0xff]
    %v804 = vld [vmem:[%s8 + $0x48] sm:$0xff]
    %v805 = vld [vmem:[%s8 + $0x50] sm:$0xff]
    %v806 = vld [vmem:[%s8 + $0x58] sm:$0xff]
    %808 = vset.pattern.permute.xlu0 0
    %809 = vperm.xlu0 %808, %v795
    %v810 = vpop.permute.xlu0 %809
    %813 = vset.pattern.permute.xlu0 0
    %814 = vperm.xlu0 %813, %v796
    %v815 = vpop.permute.xlu0 %814
    %818 = vset.pattern.permute.xlu0 0
    %819 = vperm.xlu0 %818, %v797
    %v820 = vpop.permute.xlu0 %819
    %823 = vset.pattern.permute.xlu0 0
    %824 = vperm.xlu0 %823, %v798
    %v825 = vpop.permute.xlu0 %824
    %828 = vset.pattern.permute.xlu0 0
    %829 = vperm.xlu0 %828, %v799
    %v830 = vpop.permute.xlu0 %829
    %833 = vset.pattern.permute.xlu0 0
    %834 = vperm.xlu0 %833, %v800
    %v835 = vpop.permute.xlu0 %834
    %838 = vset.pattern.permute.xlu0 0
    %839 = vperm.xlu0 %838, %v801
    %v840 = vpop.permute.xlu0 %839
    %843 = vset.pattern.permute.xlu0 0
    %844 = vperm.xlu0 %843, %v802
    %v845 = vpop.permute.xlu0 %844
    %848 = vset.pattern.permute.xlu0 0
    %849 = vperm.xlu0 %848, %v803
    %v850 = vpop.permute.xlu0 %849
    %853 = vset.pattern.permute.xlu0 0
    %854 = vperm.xlu0 %853, %v804
    %v855 = vpop.permute.xlu0 %854
    %858 = vset.pattern.permute.xlu0 0
    %859 = vperm.xlu0 %858, %v805
    %v860 = vpop.permute.xlu0 %859
    %863 = vset.pattern.permute.xlu0 0
    %864 = vperm.xlu0 %863, %v806
    %v865 = vpop.permute.xlu0 %864
    %v879 = vunpack.c.l.b16 %v783
    %v880 = vunpack.c.l.b16 %v784
    %v881 = vunpack.c.l.b16 %v785
    %v882 = vunpack.c.l.b16 %v786
    %v883 = vunpack.c.l.b16 %v787
    %v884 = vunpack.c.l.b16 %v788
    %v885 = vunpack.c.l.b16 %v789
    %v886 = vunpack.c.l.b16 %v790
    %v887 = vunpack.c.l.b16 %v791
    %v888 = vunpack.c.l.b16 %v792
    %v889 = vunpack.c.l.b16 %v793
    %v890 = vunpack.c.l.b16 %v794
    %v891 = vpack.c.b16 %v880, %v879
    %v892 = vpack.c.b16 %v882, %v881
    %v893 = vpack.c.b16 %v884, %v883
    %v894 = vpack.c.b16 %v886, %v885
    %v895 = vpack.c.b16 %v888, %v887
    %v896 = vpack.c.b16 %v890, %v889
    %v898 = vsel %vm434, %v891, 0
    %v901 = vsel %vm434, %v892, 0
    %v904 = vsel %vm434, %v893, 0
    %v907 = vsel %vm434, %v894, 0
    %v910 = vsel %vm434, %v895, 0
    %v913 = vsel %vm434, %v896, 0
    %915 = vmatprep.subr.bf16.mxu0 0
    %916 = vmatpush1.bf16.msra.mxu0 %v777
    %917 = vmatprep.subr.bf16.mxu0 0
    %918 = vmatpush1.bf16.msra.mxu0 %v778
    %919 = vmatprep.subr.bf16.mxu0 0
    %920 = vmatpush1.bf16.msra.mxu0 %v779
    %921 = vmatprep.subr.bf16.mxu0 0
    %922 = vmatpush1.bf16.msra.mxu0 %v780
    %923 = vmatprep.subr.bf16.mxu0 0
    %924 = vmatpush1.bf16.msra.mxu0 %v781
    %925 = vmatprep.subr.bf16.mxu0 0
    %926 = vmatpush1.bf16.msra.mxu0 %v782
    %927 = vmatprep.subr.bf16.mxu0 0
    %928 = vmatpush1.bf16.msra.mxu0 0
    %929 = vmatprep.subr.bf16.mxu0 0
    %930 = vmatpush1.bf16.msra.mxu0 0
    %931 = vmatprep.subr.bf16.mxu0 0
    %932 = vmatpush1.bf16.msra.mxu0 0
    %933 = vmatprep.subr.bf16.mxu0 0
    %934 = vmatpush1.bf16.msra.mxu0 0
    %935 = vmatprep.subr.bf16.mxu0 0
    %936 = vmatpush1.bf16.msra.mxu0 0
    %937 = vmatprep.subr.bf16.mxu0 0
    %938 = vmatpush1.bf16.msra.mxu0 0
    %939 = vmatprep.subr.bf16.mxu0 0
    %940 = vmatpush1.bf16.msra.mxu0 0
    %941 = vmatprep.subr.bf16.mxu0 0
    %942 = vmatpush1.bf16.msra.mxu0 0
    %943 = vmatprep.subr.bf16.mxu0 0
    %944 = vmatpush1.bf16.msra.mxu0 0
    %945 = vmatprep.subr.bf16.mxu0 0
    %946 = vmatpush1.bf16.msra.mxu0 0
    %947 = vmatprep.mubr.bf16.mxu0 0
    %948 = vmatmul.mubr.bf16.gmra.mrb[0].mxu0 %v898
    %v949 = vpop.f32.mrb[0].mxu0
    %v950 = vadd.f32 %v810, %v949
    %v951 = vpop.f32.mrb[0].mxu0
    %v952 = vpop.f32.mrb[0].mxu0
    %v953 = vadd.f32 %v815, %v952
    %v954 = vpop.f32.mrb[0].mxu0
    %955 = vmatprep.mubr.bf16.mxu0 0
    %956 = vmatmul.mubr.bf16.gmra.mrb[0].mxu0 %v901
    %v957 = vpop.f32.mrb[0].mxu0
    %v958 = vadd.f32 %v820, %v957
    %v959 = vpop.f32.mrb[0].mxu0
    %v960 = vpop.f32.mrb[0].mxu0
    %v961 = vadd.f32 %v825, %v960
    %v962 = vpop.f32.mrb[0].mxu0
    %963 = vmatprep.mubr.bf16.mxu0 0
    %964 = vmatmul.mubr.bf16.gmra.mrb[0].mxu0 %v904
    %v965 = vpop.f32.mrb[0].mxu0
    %v966 = vadd.f32 %v830, %v965
    %v967 = vpop.f32.mrb[0].mxu0
    %v968 = vpop.f32.mrb[0].mxu0
    %v969 = vadd.f32 %v835, %v968
    %v970 = vpop.f32.mrb[0].mxu0
    %971 = vmatprep.mubr.bf16.mxu0 0
    %972 = vmatmul.mubr.bf16.gmra.mrb[0].mxu0 %v907
    %v973 = vpop.f32.mrb[0].mxu0
    %v974 = vadd.f32 %v840, %v973
    %v975 = vpop.f32.mrb[0].mxu0
    %v976 = vpop.f32.mrb[0].mxu0
    %v977 = vadd.f32 %v845, %v976
    %v978 = vpop.f32.mrb[0].mxu0
    %979 = vmatprep.mubr.bf16.mxu0 0
    %980 = vmatmul.mubr.bf16.gmra.mrb[0].mxu0 %v910
    %v981 = vpop.f32.mrb[0].mxu0
    %v982 = vadd.f32 %v850, %v981
    %v983 = vpop.f32.mrb[0].mxu0
    %v984 = vpop.f32.mrb[0].mxu0
    %v985 = vadd.f32 %v855, %v984
    %v986 = vpop.f32.mrb[0].mxu0
    %987 = vmatprep.mubr.bf16.mxu0 0
    %988 = vmatmul.mubr.bf16.gmra.mrb[0].mxu0 %v913
    %v989 = vpop.f32.mrb[0].mxu0
    %v990 = vadd.f32 %v860, %v989
    %v991 = vpop.f32.mrb[0].mxu0
    %v992 = vpop.f32.mrb[0].mxu0
    %v993 = vadd.f32 %v865, %v992
    %v994 = vpop.f32.mrb[0].mxu0
    %995 = vdwg.mxu0
    %v996 = vmax.f32 %v950, 0.0
    %v997 = vmax.f32 %v953, 0.0
    %v998 = vmax.f32 %v958, 0.0
    %v999 = vmax.f32 %v961, 0.0
    %v1000 = vmax.f32 %v966, 0.0
    %v1001 = vmax.f32 %v969, 0.0
    %v1002 = vmax.f32 %v974, 0.0
    %v1003 = vmax.f32 %v977, 0.0
    %v1004 = vmax.f32 %v982, 0.0
    %v1005 = vmax.f32 %v985, 0.0
    %v1006 = vmax.f32 %v990, 0.0
    %v1007 = vmax.f32 %v993, 0.0
    %v1008 = vpack.c.bf16 %v997, %v996
    %v1009 = vpack.c.bf16 %v999, %v998
    %v1010 = vpack.c.bf16 %v1001, %v1000
    %v1011 = vpack.c.bf16 %v1003, %v1002
    %v1012 = vpack.c.bf16 %v1005, %v1004
    %v1013 = vpack.c.bf16 %v1007, %v1006
    %v1014 = vld [vmem:[%s9] sm:$0xf]
    %v1015 = vld [vmem:[%s9 + $0x4] sm:$0xf]
    %v1016 = vld [vmem:[%s9 + $0x8] sm:$0xf]
    %v1017 = vld [vmem:[%s9 + $0xc] sm:$0xf]
    %v1018 = vld [vmem:[%s9 + $0x10] sm:$0xf]
    %v1019 = vld [vmem:[%s9 + $0x14] sm:$0xf]
    %v1020 = vld [vmem:[%s9 + $0x18] sm:$0xf]
    %v1021 = vld [vmem:[%s9 + $0x1c] sm:$0xf]
    %v1022 = vld [vmem:[%s10] sm:$0xff]
    %v1023 = vld [vmem:[%s10 + $0x8] sm:$0xff]
    %v1024 = vld [vmem:[%s10 + $0x10] sm:$0xff]
    %v1025 = vld [vmem:[%s10 + $0x18] sm:$0xff]
    %v1026 = vld [vmem:[%s10 + $0x20] sm:$0xff]
    %v1027 = vld [vmem:[%s10 + $0x28] sm:$0xff]
    %v1028 = vld [vmem:[%s10 + $0x30] sm:$0xff]
    %v1029 = vld [vmem:[%s10 + $0x38] sm:$0xff]
    %1031 = vset.pattern.permute.xlu0 0
    %1032 = vperm.xlu0 %1031, %v1022
    %v1033 = vpop.permute.xlu0 %1032
    %1036 = vset.pattern.permute.xlu0 0
    %1037 = vperm.xlu0 %1036, %v1023
    %v1038 = vpop.permute.xlu0 %1037
    %1041 = vset.pattern.permute.xlu0 0
    %1042 = vperm.xlu0 %1041, %v1024
    %v1043 = vpop.permute.xlu0 %1042
    %1046 = vset.pattern.permute.xlu0 0
    %1047 = vperm.xlu0 %1046, %v1025
    %v1048 = vpop.permute.xlu0 %1047
    %1051 = vset.pattern.permute.xlu0 0
    %1052 = vperm.xlu0 %1051, %v1026
    %v1053 = vpop.permute.xlu0 %1052
    %1056 = vset.pattern.permute.xlu0 0
    %1057 = vperm.xlu0 %1056, %v1027
    %v1058 = vpop.permute.xlu0 %1057
    %1061 = vset.pattern.permute.xlu0 0
    %1062 = vperm.xlu0 %1061, %v1028
    %v1063 = vpop.permute.xlu0 %1062
    %1066 = vset.pattern.permute.xlu0 0
    %1067 = vperm.xlu0 %1066, %v1029
    %v1068 = vpop.permute.xlu0 %1067
    %v1078 = vunpack.c.l.b16 %v1014
    %v1079 = vunpack.c.l.b16 %v1015
    %v1080 = vunpack.c.l.b16 %v1016
    %v1081 = vunpack.c.l.b16 %v1017
    %v1082 = vunpack.c.l.b16 %v1018
    %v1083 = vunpack.c.l.b16 %v1019
    %v1084 = vunpack.c.l.b16 %v1020
    %v1085 = vunpack.c.l.b16 %v1021
    %v1086 = vpack.c.b16 %v1079, %v1078
    %v1087 = vpack.c.b16 %v1081, %v1080
    %v1088 = vpack.c.b16 %v1083, %v1082
    %v1089 = vpack.c.b16 %v1085, %v1084
    %v1091 = vsel %vm434, %v1086, 0
    %v1094 = vsel %vm434, %v1087, 0
    %v1097 = vsel %vm434, %v1088, 0
    %v1100 = vsel %vm434, %v1089, 0
    %1102 = vmatprep.subr.bf16.mxu0 0
    %1103 = vmatpush1.bf16.msra.mxu0 %v1008
    %1104 = vmatprep.subr.bf16.mxu0 0
    %1105 = vmatpush1.bf16.msra.mxu0 %v1009
    %1106 = vmatprep.subr.bf16.mxu0 0
    %1107 = vmatpush1.bf16.msra.mxu0 %v1010
    %1108 = vmatprep.subr.bf16.mxu0 0
    %1109 = vmatpush1.bf16.msra.mxu0 %v1011
    %1110 = vmatprep.subr.bf16.mxu0 0
    %1111 = vmatpush1.bf16.msra.mxu0 %v1012
    %1112 = vmatprep.subr.bf16.mxu0 0
    %1113 = vmatpush1.bf16.msra.mxu0 %v1013
    %1114 = vmatprep.subr.bf16.mxu0 0
    %1115 = vmatpush1.bf16.msra.mxu0 0
    %1116 = vmatprep.subr.bf16.mxu0 0
    %1117 = vmatpush1.bf16.msra.mxu0 0
    %1118 = vmatprep.subr.bf16.mxu0 0
    %1119 = vmatpush1.bf16.msra.mxu0 0
    %1120 = vmatprep.subr.bf16.mxu0 0
    %1121 = vmatpush1.bf16.msra.mxu0 0
    %1122 = vmatprep.subr.bf16.mxu0 0
    %1123 = vmatpush1.bf16.msra.mxu0 0
    %1124 = vmatprep.subr.bf16.mxu0 0
    %1125 = vmatpush1.bf16.msra.mxu0 0
    %1126 = vmatprep.subr.bf16.mxu0 0
    %1127 = vmatpush1.bf16.msra.mxu0 0
    %1128 = vmatprep.subr.bf16.mxu0 0
    %1129 = vmatpush1.bf16.msra.mxu0 0
    %1130 = vmatprep.subr.bf16.mxu0 0
    %1131 = vmatpush1.bf16.msra.mxu0 0
    %1132 = vmatprep.subr.bf16.mxu0 0
    %1133 = vmatpush1.bf16.msra.mxu0 0
    %1134 = vmatprep.mubr.bf16.mxu0 0
    %1135 = vmatmul.mubr.bf16.gmra.mrb[0].mxu0 %v1091
    %v1136 = vpop.f32.mrb[0].mxu0
    %v1137 = vadd.f32 %v1033, %v1136
    %v1138 = vpop.f32.mrb[0].mxu0
    %v1139 = vpop.f32.mrb[0].mxu0
    %v1140 = vadd.f32 %v1038, %v1139
    %v1141 = vpop.f32.mrb[0].mxu0
    %1142 = vmatprep.mubr.bf16.mxu0 0
    %1143 = vmatmul.mubr.bf16.gmra.mrb[0].mxu0 %v1094
    %v1144 = vpop.f32.mrb[0].mxu0
    %v1145 = vadd.f32 %v1043, %v1144
    %v1146 = vpop.f32.mrb[0].mxu0
    %v1147 = vpop.f32.mrb[0].mxu0
    %v1148 = vadd.f32 %v1048, %v1147
    %v1149 = vpop.f32.mrb[0].mxu0
    %1150 = vmatprep.mubr.bf16.mxu0 0
    %1151 = vmatmul.mubr.bf16.gmra.mrb[0].mxu0 %v1097
    %v1152 = vpop.f32.mrb[0].mxu0
    %v1153 = vadd.f32 %v1053, %v1152
    %v1154 = vpop.f32.mrb[0].mxu0
    %v1155 = vpop.f32.mrb[0].mxu0
    %v1156 = vadd.f32 %v1058, %v1155
    %v1157 = vpop.f32.mrb[0].mxu0
    %1158 = vmatprep.mubr.bf16.mxu0 0
    %1159 = vmatmul.mubr.bf16.gmra.mrb[0].mxu0 %v1100
    %v1160 = vpop.f32.mrb[0].mxu0
    %v1161 = vadd.f32 %v1063, %v1160
    %v1162 = vpop.f32.mrb[0].mxu0
    %v1163 = vpop.f32.mrb[0].mxu0
    %v1164 = vadd.f32 %v1068, %v1163
    %v1165 = vpop.f32.mrb[0].mxu0
    %1166 = vdwg.mxu0
    %1167 = vst [vmem:[#allocation2] sm:$0xff] %v1137
    %1168 = vst [vmem:[#allocation2 + $0x8] sm:$0xff] %v1140
    %1169 = vst [vmem:[#allocation2 + $0x10] sm:$0xff] %v1145
    %1170 = vst [vmem:[#allocation2 + $0x18] sm:$0xff] %v1148
    %1171 = vst [vmem:[#allocation2 + $0x20] sm:$0xff] %v1153
    %1172 = vst [vmem:[#allocation2 + $0x28] sm:$0xff] %v1156
    %1173 = vst [vmem:[#allocation2 + $0x30] sm:$0xff] %v1161
    %1174 = vst [vmem:[#allocation2 + $0x38] sm:$0xff] %v1164
    // Predicated region
    $region46: #{tpu_custom_call.1} parent=1 // pred_check
      _
    $region47: #{tpu_custom_call.1} parent=1 // pred_check_branch
      %1176 = sbr.rel (0) target = $region49
    $region48: #{tpu_custom_call.1} parent=1 // pred_region
      %s1178 = ssub.s32 1024, 1024
      %1179 = vsyncadd [#allocation3], %s1178
      %s1180 = sshll.u32 [#allocation2], 4
      %s1181 = int_to_ptr.vmem [resolvable:$true] %s1180
      %1186 = dma.vmem_to_hbm [thread:$0]  %s1181, 1024, %s11, [#allocation3], 128, 128, 8
    $region49: #{tpu_custom_call.1} parent=1 // pred_fallthru
      _
    // Predicated region
    $region50: #{tpu_custom_call.1} parent=1 // pred_check
      _
    $region51: #{tpu_custom_call.1} parent=1 // pred_check_branch
      %1188 = sbr.rel (0) target = $region53
    $region52: #{tpu_custom_call.1} parent=1 // pred_region
      %1189 = dma.done [#allocation3], 1024
    $region53: #{tpu_custom_call.1} parent=1 // pred_fallthru
      _
    %1190 = vsyncpa [#allocation3], 1

// kernel: tpu_custom_call.1
$region0: #{tpu_custom_call.1}
  #allocation0 [shape = 'u32[]', space=smem, size = 0x4, offset = 0x4, fixed_abs, tag = 'smem constant byte address 0x4 - core index']
  #allocation1 [shape = 'u32[144,128]{1,0:T(1,128)}', space=vmem, size = 0x12000, scoped, tag = 'internal scratch']
  %s0 = inlined_call_operand.vmem [shape: f32[128,32], index: 0, kind: input, shape index: {}]
  %s1 = inlined_call_operand.vmem [shape: bf16[96,32], index: 1, kind: input, shape index: {}]
  %s2 = inlined_call_operand.vmem [shape: f32[96,1], index: 2, kind: input, shape index: {}]
  %s3 = inlined_call_operand.vmem [shape: bf16[96,96], index: 3, kind: input, shape index: {}]
  %s4 = inlined_call_operand.vmem [shape: f32[96,1], index: 4, kind: input, shape index: {}]
  %s5 = inlined_call_operand.vmem [shape: bf16[96,96], index: 5, kind: input, shape index: {}]
  %s6 = inlined_call_operand.vmem [shape: f32[96,1], index: 6, kind: input, shape index: {}]
  %s7 = inlined_call_operand.vmem [shape: bf16[96,96], index: 7, kind: input, shape index: {}]
  %s8 = inlined_call_operand.vmem [shape: f32[96,1], index: 8, kind: input, shape index: {}]
  %s9 = inlined_call_operand.vmem [shape: bf16[64,96], index: 9, kind: input, shape index: {}]
  %s10 = inlined_call_operand.vmem [shape: f32[64,1], index: 10, kind: input, shape index: {}]
  %s11 = inlined_call_operand.hbm [shape: f32[64,128], index: 11, kind: output, shape index: {}]
  %s12 = sld [smem:[#allocation0]]
  $region54: #{tpu_custom_call.1} parent=0
    _
  %s14 = ssub.s32 1, %s12
  %s15 = scalar_select 0, %s14, %s12
  $region1: #{tpu_custom_call.1} parent=0
    #allocation2 [shape = 'u8[32768]{0}', space=vmem, size = 0x8000, scoped, tag = 'output window, operand 0, single buffered']
    #allocation3 [shape = 's32[1]{0}', space=sflag, size = 0x4, scoped, tag = 'scoped memory for tpu_custom_call.1']
    %16 = vsyncpa [#allocation3], 0
    // Predicated region
    $region2: #{tpu_custom_call.1} parent=1 // pred_check
      _
    $region3: #{tpu_custom_call.1} parent=1 // pred_check_branch
      %18 = sbr.rel (0) target = $region5
    $region4: #{tpu_custom_call.1} parent=1 // pred_region
      _
    $region5: #{tpu_custom_call.1} parent=1 // pred_fallthru
      _
    // Predicated region
    $region6: #{tpu_custom_call.1} parent=1 // pred_check
      _
    $region7: #{tpu_custom_call.1} parent=1 // pred_check_branch
      %20 = sbr.rel (0) target = $region9
    $region8: #{tpu_custom_call.1} parent=1 // pred_region
      _
    $region9: #{tpu_custom_call.1} parent=1 // pred_fallthru
      _
    // Predicated region
    $region10: #{tpu_custom_call.1} parent=1 // pred_check
      _
    $region11: #{tpu_custom_call.1} parent=1 // pred_check_branch
      %22 = sbr.rel (0) target = $region13
    $region12: #{tpu_custom_call.1} parent=1 // pred_region
      _
    $region13: #{tpu_custom_call.1} parent=1 // pred_fallthru
      _
    // Predicated region
    $region14: #{tpu_custom_call.1} parent=1 // pred_check
      _
    $region15: #{tpu_custom_call.1} parent=1 // pred_check_branch
      %24 = sbr.rel (0) target = $region17
    $region16: #{tpu_custom_call.1} parent=1 // pred_region
      _
    $region17: #{tpu_custom_call.1} parent=1 // pred_fallthru
      _
    // Predicated region
    $region18: #{tpu_custom_call.1} parent=1 // pred_check
      _
    $region19: #{tpu_custom_call.1} parent=1 // pred_check_branch
      %26 = sbr.rel (0) target = $region21
    $region20: #{tpu_custom_call.1} parent=1 // pred_region
      _
    $region21: #{tpu_custom_call.1} parent=1 // pred_fallthru
      _
    // Predicated region
    $region22: #{tpu_custom_call.1} parent=1 // pred_check
      _
    $region23: #{tpu_custom_call.1} parent=1 // pred_check_branch
      %28 = sbr.rel (0) target = $region25
    $region24: #{tpu_custom_call.1} parent=1 // pred_region
      _
    $region25: #{tpu_custom_call.1} parent=1 // pred_fallthru
      _
    // Predicated region
    $region26: #{tpu_custom_call.1} parent=1 // pred_check
      _
    $region27: #{tpu_custom_call.1} parent=1 // pred_check_branch
      %30 = sbr.rel (0) target = $region29
    $region28: #{tpu_custom_call.1} parent=1 // pred_region
      _
    $region29: #{tpu_custom_call.1} parent=1 // pred_fallthru
      _
    // Predicated region
    $region30: #{tpu_custom_call.1} parent=1 // pred_check
      _
    $region31: #{tpu_custom_call.1} parent=1 // pred_check_branch
      %32 = sbr.rel (0) target = $region33
    $region32: #{tpu_custom_call.1} parent=1 // pred_region
      _
    $region33: #{tpu_custom_call.1} parent=1 // pred_fallthru
      _
    // Predicated region
    $region34: #{tpu_custom_call.1} parent=1 // pred_check
      _
    $region35: #{tpu_custom_call.1} parent=1 // pred_check_branch
      %34 = sbr.rel (0) target = $region37
    $region36: #{tpu_custom_call.1} parent=1 // pred_region
      _
    $region37: #{tpu_custom_call.1} parent=1 // pred_fallthru
      _
    // Predicated region
    $region38: #{tpu_custom_call.1} parent=1 // pred_check
      _
    $region39: #{tpu_custom_call.1} parent=1 // pred_check_branch
      %36 = sbr.rel (0) target = $region41
    $region40: #{tpu_custom_call.1} parent=1 // pred_region
      _
    $region41: #{tpu_custom_call.1} parent=1 // pred_fallthru
      _
    // Predicated region
    $region42: #{tpu_custom_call.1} parent=1 // pred_check
      _
    $region43: #{tpu_custom_call.1} parent=1 // pred_check_branch
      %38 = sbr.rel (0) target = $region45
    $region44: #{tpu_custom_call.1} parent=1 // pred_region
      _
    $region45: #{tpu_custom_call.1} parent=1 // pred_fallthru
      _
    %v40 = vld [vmem:[%s1] sm:$0xf]
    %v41 = vld [vmem:[%s1 + $0x4] sm:$0xf]
    %v42 = vld [vmem:[%s1 + $0x8] sm:$0xf]
    %v43 = vld [vmem:[%s1 + $0xc] sm:$0xf]
    %v44 = vld [vmem:[%s1 + $0x10] sm:$0xf]
    %v45 = vld [vmem:[%s1 + $0x14] sm:$0xf]
    %v46 = vld [vmem:[%s1 + $0x18] sm:$0xf]
    %v47 = vld [vmem:[%s1 + $0x1c] sm:$0xf]
    %v48 = vld [vmem:[%s1 + $0x20] sm:$0xf]
    %v49 = vld [vmem:[%s1 + $0x24] sm:$0xf]
    %v50 = vld [vmem:[%s1 + $0x28] sm:$0xf]
    %v51 = vld [vmem:[%s1 + $0x2c] sm:$0xf]
    %v52 = vld [vmem:[%s0] sm:$0xff]
    %v53 = vld [vmem:[%s0 + $0x8] sm:$0xff]
    %v54 = vld [vmem:[%s0 + $0x10] sm:$0xff]
    %v55 = vld [vmem:[%s0 + $0x18] sm:$0xff]
    %v56 = vld [vmem:[%s0 + $0x20] sm:$0xff]
    %v57 = vld [vmem:[%s0 + $0x28] sm:$0xff]
    %v58 = vld [vmem:[%s0 + $0x30] sm:$0xff]
    %v59 = vld [vmem:[%s0 + $0x38] sm:$0xff]
    %v60 = vld [vmem:[%s0 + $0x40] sm:$0xff]
    %v61 = vld [vmem:[%s0 + $0x48] sm:$0xff]
    %v62 = vld [vmem:[%s0 + $0x50] sm:$0xff]
    %v63 = vld [vmem:[%s0 + $0x58] sm:$0xff]
    %v64 = vld [vmem:[%s0 + $0x60] sm:$0xff]
    %v65 = vld [vmem:[%s0 + $0x68] sm:$0xff]
    %v66 = vld [vmem:[%s0 + $0x70] sm:$0xff]
    %v67 = vld [vmem:[%s0 + $0x78] sm:$0xff]
    %v68 = vpack.c.bf16 %v53, %v52
    %v69 = vpack.c.bf16 %v55, %v54
    %v70 = vpack.c.bf16 %v57, %v56
    %v71 = vpack.c.bf16 %v59, %v58
    %v72 = vpack.c.bf16 %v61, %v60
    %v73 = vpack.c.bf16 %v63, %v62
    %v74 = vpack.c.bf16 %v65, %v64
    %v75 = vpack.c.bf16 %v67, %v66
    %v76 = vld [vmem:[%s2] sm:$0xff]
    %v77 = vld [vmem:[%s2 + $0x8] sm:$0xff]
    %v78 = vld [vmem:[%s2 + $0x10] sm:$0xff]
    %v79 = vld [vmem:[%s2 + $0x18] sm:$0xff]
    %v80 = vld [vmem:[%s2 + $0x20] sm:$0xff]
    %v81 = vld [vmem:[%s2 + $0x28] sm:$0xff]
    %v82 = vld [vmem:[%s2 + $0x30] sm:$0xff]
    %v83 = vld [vmem:[%s2 + $0x38] sm:$0xff]
    %v84 = vld [vmem:[%s2 + $0x40] sm:$0xff]
    %v85 = vld [vmem:[%s2 + $0x48] sm:$0xff]
    %v86 = vld [vmem:[%s2 + $0x50] sm:$0xff]
    %v87 = vld [vmem:[%s2 + $0x58] sm:$0xff]
    %89 = vset.pattern.permute.xlu0 0
    %90 = vperm.xlu0 %89, %v76
    %v91 = vpop.permute.xlu0 %90
    %94 = vset.pattern.permute.xlu0 0
    %95 = vperm.xlu0 %94, %v77
    %v96 = vpop.permute.xlu0 %95
    %99 = vset.pattern.permute.xlu0 0
    %100 = vperm.xlu0 %99, %v78
    %v101 = vpop.permute.xlu0 %100
    %104 = vset.pattern.permute.xlu0 0
    %105 = vperm.xlu0 %104, %v79
    %v106 = vpop.permute.xlu0 %105
    %109 = vset.pattern.permute.xlu0 0
    %110 = vperm.xlu0 %109, %v80
    %v111 = vpop.permute.xlu0 %110
    %114 = vset.pattern.permute.xlu0 0
    %115 = vperm.xlu0 %114, %v81
    %v116 = vpop.permute.xlu0 %115
    %119 = vset.pattern.permute.xlu0 0
    %120 = vperm.xlu0 %119, %v82
    %v121 = vpop.permute.xlu0 %120
    %124 = vset.pattern.permute.xlu0 0
    %125 = vperm.xlu0 %124, %v83
    %v126 = vpop.permute.xlu0 %125
    %129 = vset.pattern.permute.xlu0 0
    %130 = vperm.xlu0 %129, %v84
    %v131 = vpop.permute.xlu0 %130
    %134 = vset.pattern.permute.xlu0 0
    %135 = vperm.xlu0 %134, %v85
    %v136 = vpop.permute.xlu0 %135
    %139 = vset.pattern.permute.xlu0 0
    %140 = vperm.xlu0 %139, %v86
    %v141 = vpop.permute.xlu0 %140
    %144 = vset.pattern.permute.xlu0 0
    %145 = vperm.xlu0 %144, %v87
    %v146 = vpop.permute.xlu0 %145
    %v160 = vunpack.c.l.b16 %v40
    %v161 = vunpack.c.l.b16 %v41
    %v162 = vunpack.c.l.b16 %v42
    %v163 = vunpack.c.l.b16 %v43
    %v164 = vunpack.c.l.b16 %v44
    %v165 = vunpack.c.l.b16 %v45
    %v166 = vunpack.c.l.b16 %v46
    %v167 = vunpack.c.l.b16 %v47
    %v168 = vunpack.c.l.b16 %v48
    %v169 = vunpack.c.l.b16 %v49
    %v170 = vunpack.c.l.b16 %v50
    %v171 = vunpack.c.l.b16 %v51
    %v172 = vpack.c.b16 %v161, %v160
    %v173 = vpack.c.b16 %v163, %v162
    %v174 = vpack.c.b16 %v165, %v164
    %v175 = vpack.c.b16 %v167, %v166
    %v176 = vpack.c.b16 %v169, %v168
    %v177 = vpack.c.b16 %v171, %v170
    %vm178 = vcmask 261120
    %v180 = vsel %vm178, %v172, 0
    %v183 = vsel %vm178, %v173, 0
    %v186 = vsel %vm178, %v174, 0
    %v189 = vsel %vm178, %v175, 0
    %v192 = vsel %vm178, %v176, 0
    %v195 = vsel %vm178, %v177, 0
    %v198 = vsel %vm178, %v68, 0
    %v201 = vsel %vm178, %v69, 0
    %v204 = vsel %vm178, %v70, 0
    %v207 = vsel %vm178, %v71, 0
    %v210 = vsel %vm178, %v72, 0
    %v213 = vsel %vm178, %v73, 0
    %v216 = vsel %vm178, %v74, 0
    %v219 = vsel %vm178, %v75, 0
    %221 = vmatprep.subr.bf16.mxu0 0
    %222 = vmatpush1.bf16.xpose.msra.mxu0 %v198
    %223 = vmatprep.subr.bf16.mxu0 0
    %224 = vmatpush1.bf16.xpose.msra.mxu0 %v201
    %225 = vmatprep.subr.bf16.mxu0 0
    %226 = vmatpush1.bf16.xpose.msra.mxu0 %v204
    %227 = vmatprep.subr.bf16.mxu0 0
    %228 = vmatpush1.bf16.xpose.msra.mxu0 %v207
    %229 = vmatprep.subr.bf16.mxu0 0
    %230 = vmatpush1.bf16.xpose.msra.mxu0 %v210
    %231 = vmatprep.subr.bf16.mxu0 0
    %232 = vmatpush1.bf16.xpose.msra.mxu0 %v213
    %233 = vmatprep.subr.bf16.mxu0 0
    %234 = vmatpush1.bf16.xpose.msra.mxu0 %v216
    %235 = vmatprep.subr.bf16.mxu0 0
    %236 = vmatpush1.bf16.xpose.msra.mxu0 %v219
    %237 = vmatprep.subr.bf16.mxu0 0
    %238 = vmatpush1.bf16.xpose.msra.mxu0 0
    %239 = vmatprep.subr.bf16.mxu0 0
    %240 = vmatpush1.bf16.xpose.msra.mxu0 0
    %241 = vmatprep.subr.bf16.mxu0 0
    %242 = vmatpush1.bf16.xpose.msra.mxu0 0
    %243 = vmatprep.subr.bf16.mxu0 0
    %244 = vmatpush1.bf16.xpose.msra.mxu0 0
    %245 = vmatprep.subr.bf16.mxu0 0
    %246 = vmatpush1.bf16.xpose.msra.mxu0 0
    %247 = vmatprep.subr.bf16.mxu0 0
    %248 = vmatpush1.bf16.xpose.msra.mxu0 0
    %249 = vmatprep.subr.bf16.mxu0 0
    %250 = vmatpush1.bf16.xpose.msra.mxu0 0
    %251 = vmatprep.subr.bf16.mxu0 0
    %252 = vmatpush1.bf16.xpose.msra.mxu0 0
    %253 = vmatprep.mubr.bf16.mxu0 0
    %254 = vmatmul.mubr.bf16.gmra.mrb[0].mxu0 %v180
    %v255 = vpop.f32.mrb[0].mxu0
    %v256 = vadd.f32 %v91, %v255
    %v257 = vpop.f32.mrb[0].mxu0
    %v258 = vpop.f32.mrb[0].mxu0
    %v259 = vadd.f32 %v96, %v258
    %v260 = vpop.f32.mrb[0].mxu0
    %261 = vmatprep.mubr.bf16.mxu0 0
    %262 = vmatmul.mubr.bf16.gmra.mrb[0].mxu0 %v183
    %v263 = vpop.f32.mrb[0].mxu0
    %v264 = vadd.f32 %v101, %v263
    %v265 = vpop.f32.mrb[0].mxu0
    %v266 = vpop.f32.mrb[0].mxu0
    %v267 = vadd.f32 %v106, %v266
    %v268 = vpop.f32.mrb[0].mxu0
    %269 = vmatprep.mubr.bf16.mxu0 0
    %270 = vmatmul.mubr.bf16.gmra.mrb[0].mxu0 %v186
    %v271 = vpop.f32.mrb[0].mxu0
    %v272 = vadd.f32 %v111, %v271
    %v273 = vpop.f32.mrb[0].mxu0
    %v274 = vpop.f32.mrb[0].mxu0
    %v275 = vadd.f32 %v116, %v274
    %v276 = vpop.f32.mrb[0].mxu0
    %277 = vmatprep.mubr.bf16.mxu0 0
    %278 = vmatmul.mubr.bf16.gmra.mrb[0].mxu0 %v189
    %v279 = vpop.f32.mrb[0].mxu0
    %v280 = vadd.f32 %v121, %v279
    %v281 = vpop.f32.mrb[0].mxu0
    %v282 = vpop.f32.mrb[0].mxu0
    %v283 = vadd.f32 %v126, %v282
    %v284 = vpop.f32.mrb[0].mxu0
    %285 = vmatprep.mubr.bf16.mxu0 0
    %286 = vmatmul.mubr.bf16.gmra.mrb[0].mxu0 %v192
    %v287 = vpop.f32.mrb[0].mxu0
    %v288 = vadd.f32 %v131, %v287
    %v289 = vpop.f32.mrb[0].mxu0
    %v290 = vpop.f32.mrb[0].mxu0
    %v291 = vadd.f32 %v136, %v290
    %v292 = vpop.f32.mrb[0].mxu0
    %293 = vmatprep.mubr.bf16.mxu0 0
    %294 = vmatmul.mubr.bf16.gmra.mrb[0].mxu0 %v195
    %v295 = vpop.f32.mrb[0].mxu0
    %v296 = vadd.f32 %v141, %v295
    %v297 = vpop.f32.mrb[0].mxu0
    %v298 = vpop.f32.mrb[0].mxu0
    %v299 = vadd.f32 %v146, %v298
    %v300 = vpop.f32.mrb[0].mxu0
    %301 = vdwg.mxu0
    %v302 = vmax.f32 %v256, 0.0
    %v303 = vmax.f32 %v259, 0.0
    %v304 = vmax.f32 %v264, 0.0
    %v305 = vmax.f32 %v267, 0.0
    %v306 = vmax.f32 %v272, 0.0
    %v307 = vmax.f32 %v275, 0.0
    %v308 = vmax.f32 %v280, 0.0
    %v309 = vmax.f32 %v283, 0.0
    %v310 = vmax.f32 %v288, 0.0
    %v311 = vmax.f32 %v291, 0.0
    %v312 = vmax.f32 %v296, 0.0
    %v313 = vmax.f32 %v299, 0.0
    %v314 = vpack.c.bf16 %v303, %v302
    %v315 = vpack.c.bf16 %v305, %v304
    %v316 = vpack.c.bf16 %v307, %v306
    %v317 = vpack.c.bf16 %v309, %v308
    %v318 = vpack.c.bf16 %v311, %v310
    %v319 = vpack.c.bf16 %v313, %v312
    %v320 = vld [vmem:[%s3] sm:$0xf]
    %v321 = vld [vmem:[%s3 + $0x4] sm:$0xf]
    %v322 = vld [vmem:[%s3 + $0x8] sm:$0xf]
    %v323 = vld [vmem:[%s3 + $0xc] sm:$0xf]
    %v324 = vld [vmem:[%s3 + $0x10] sm:$0xf]
    %v325 = vld [vmem:[%s3 + $0x14] sm:$0xf]
    %v326 = vld [vmem:[%s3 + $0x18] sm:$0xf]
    %v327 = vld [vmem:[%s3 + $0x1c] sm:$0xf]
    %v328 = vld [vmem:[%s3 + $0x20] sm:$0xf]
    %v329 = vld [vmem:[%s3 + $0x24] sm:$0xf]
    %v330 = vld [vmem:[%s3 + $0x28] sm:$0xf]
    %v331 = vld [vmem:[%s3 + $0x2c] sm:$0xf]
    %v332 = vld [vmem:[%s4] sm:$0xff]
    %v333 = vld [vmem:[%s4 + $0x8] sm:$0xff]
    %v334 = vld [vmem:[%s4 + $0x10] sm:$0xff]
    %v335 = vld [vmem:[%s4 + $0x18] sm:$0xff]
    %v336 = vld [vmem:[%s4 + $0x20] sm:$0xff]
    %v337 = vld [vmem:[%s4 + $0x28] sm:$0xff]
    %v338 = vld [vmem:[%s4 + $0x30] sm:$0xff]
    %v339 = vld [vmem:[%s4 + $0x38] sm:$0xff]
    %v340 = vld [vmem:[%s4 + $0x40] sm:$0xff]
    %v341 = vld [vmem:[%s4 + $0x48] sm:$0xff]
    %v342 = vld [vmem:[%s4 + $0x50] sm:$0xff]
    %v343 = vld [vmem:[%s4 + $0x58] sm:$0xff]
    %345 = vset.pattern.permute.xlu0 0
    %346 = vperm.xlu0 %345, %v332
    %v347 = vpop.permute.xlu0 %346
    %350 = vset.pattern.permute.xlu0 0
    %351 = vperm.xlu0 %350, %v333
    %v352 = vpop.permute.xlu0 %351
    %355 = vset.pattern.permute.xlu0 0
    %356 = vperm.xlu0 %355, %v334
    %v357 = vpop.permute.xlu0 %356
    %360 = vset.pattern.permute.xlu0 0
    %361 = vperm.xlu0 %360, %v335
    %v362 = vpop.permute.xlu0 %361
    %365 = vset.pattern.permute.xlu0 0
    %366 = vperm.xlu0 %365, %v336
    %v367 = vpop.permute.xlu0 %366
    %370 = vset.pattern.permute.xlu0 0
    %371 = vperm.xlu0 %370, %v337
    %v372 = vpop.permute.xlu0 %371
    %375 = vset.pattern.permute.xlu0 0
    %376 = vperm.xlu0 %375, %v338
    %v377 = vpop.permute.xlu0 %376
    %380 = vset.pattern.permute.xlu0 0
    %381 = vperm.xlu0 %380, %v339
    %v382 = vpop.permute.xlu0 %381
    %385 = vset.pattern.permute.xlu0 0
    %386 = vperm.xlu0 %385, %v340
    %v387 = vpop.permute.xlu0 %386
    %390 = vset.pattern.permute.xlu0 0
    %391 = vperm.xlu0 %390, %v341
    %v392 = vpop.permute.xlu0 %391
    %395 = vset.pattern.permute.xlu0 0
    %396 = vperm.xlu0 %395, %v342
    %v397 = vpop.permute.xlu0 %396
    %400 = vset.pattern.permute.xlu0 0
    %401 = vperm.xlu0 %400, %v343
    %v402 = vpop.permute.xlu0 %401
    %v416 = vunpack.c.l.b16 %v320
    %v417 = vunpack.c.l.b16 %v321
    %v418 = vunpack.c.l.b16 %v322
    %v419 = vunpack.c.l.b16 %v323
    %v420 = vunpack.c.l.b16 %v324
    %v421 = vunpack.c.l.b16 %v325
    %v422 = vunpack.c.l.b16 %v326
    %v423 = vunpack.c.l.b16 %v327
    %v424 = vunpack.c.l.b16 %v328
    %v425 = vunpack.c.l.b16 %v329
    %v426 = vunpack.c.l.b16 %v330
    %v427 = vunpack.c.l.b16 %v331
    %v428 = vpack.c.b16 %v417, %v416
    %v429 = vpack.c.b16 %v419, %v418
    %v430 = vpack.c.b16 %v421, %v420
    %v431 = vpack.c.b16 %v423, %v422
    %v432 = vpack.c.b16 %v425, %v424
    %v433 = vpack.c.b16 %v427, %v426
    %vm434 = vcmask 785408
    %v436 = vsel %vm434, %v428, 0
    %v439 = vsel %vm434, %v429, 0
    %v442 = vsel %vm434, %v430, 0
    %v445 = vsel %vm434, %v431, 0
    %v448 = vsel %vm434, %v432, 0
    %v451 = vsel %vm434, %v433, 0
    %453 = vmatprep.subr.bf16.mxu0 0
    %454 = vmatpush1.bf16.msra.mxu0 %v314
    %455 = vmatprep.subr.bf16.mxu0 0
    %456 = vmatpush1.bf16.msra.mxu0 %v315
    %457 = vmatprep.subr.bf16.mxu0 0
    %458 = vmatpush1.bf16.msra.mxu0 %v316
    %459 = vmatprep.subr.bf16.mxu0 0
    %460 = vmatpush1.bf16.msra.mxu0 %v317
    %461 = vmatprep.subr.bf16.mxu0 0
    %462 = vmatpush1.bf16.msra.mxu0 %v318
    %463 = vmatprep.subr.bf16.mxu0 0
    %464 = vmatpush1.bf16.msra.mxu0 %v319
    %465 = vmatprep.subr.bf16.mxu0 0
    %466 = vmatpush1.bf16.msra.mxu0 0
    %467 = vmatprep.subr.bf16.mxu0 0
    %468 = vmatpush1.bf16.msra.mxu0 0
    %469 = vmatprep.subr.bf16.mxu0 0
    %470 = vmatpush1.bf16.msra.mxu0 0
    %471 = vmatprep.subr.bf16.mxu0 0
    %472 = vmatpush1.bf16.msra.mxu0 0
    %473 = vmatprep.subr.bf16.mxu0 0
    %474 = vmatpush1.bf16.msra.mxu0 0
    %475 = vmatprep.subr.bf16.mxu0 0
    %476 = vmatpush1.bf16.msra.mxu0 0
    %477 = vmatprep.subr.bf16.mxu0 0
    %478 = vmatpush1.bf16.msra.mxu0 0
    %479 = vmatprep.subr.bf16.mxu0 0
    %480 = vmatpush1.bf16.msra.mxu0 0
    %481 = vmatprep.subr.bf16.mxu0 0
    %482 = vmatpush1.bf16.msra.mxu0 0
    %483 = vmatprep.subr.bf16.mxu0 0
    %484 = vmatpush1.bf16.msra.mxu0 0
    %485 = vmatprep.mubr.bf16.mxu0 0
    %486 = vmatmul.mubr.bf16.gmra.mrb[0].mxu0 %v436
    %v487 = vpop.f32.mrb[0].mxu0
    %v488 = vadd.f32 %v347, %v487
    %v489 = vpop.f32.mrb[0].mxu0
    %v490 = vpop.f32.mrb[0].mxu0
    %v491 = vadd.f32 %v352, %v490
    %v492 = vpop.f32.mrb[0].mxu0
    %493 = vmatprep.mubr.bf16.mxu0 0
    %494 = vmatmul.mubr.bf16.gmra.mrb[0].mxu0 %v439
    %v495 = vpop.f32.mrb[0].mxu0
    %v496 = vadd.f32 %v357, %v495
    %v497 = vpop.f32.mrb[0].mxu0
    %v498 = vpop.f32.mrb[0].mxu0
    %v499 = vadd.f32 %v362, %v498
    %v500 = vpop.f32.mrb[0].mxu0
    %501 = vmatprep.mubr.bf16.mxu0 0
    %502 = vmatmul.mubr.bf16.gmra.mrb[0].mxu0 %v442
    %v503 = vpop.f32.mrb[0].mxu0
    %v504 = vadd.f32 %v367, %v503
    %v505 = vpop.f32.mrb[0].mxu0
    %v506 = vpop.f32.mrb[0].mxu0
    %v507 = vadd.f32 %v372, %v506
    %v508 = vpop.f32.mrb[0].mxu0
    %509 = vmatprep.mubr.bf16.mxu0 0
    %510 = vmatmul.mubr.bf16.gmra.mrb[0].mxu0 %v445
    %v511 = vpop.f32.mrb[0].mxu0
    %v512 = vadd.f32 %v377, %v511
    %v513 = vpop.f32.mrb[0].mxu0
    %v514 = vpop.f32.mrb[0].mxu0
    %v515 = vadd.f32 %v382, %v514
    %v516 = vpop.f32.mrb[0].mxu0
    %517 = vmatprep.mubr.bf16.mxu0 0
    %518 = vmatmul.mubr.bf16.gmra.mrb[0].mxu0 %v448
    %v519 = vpop.f32.mrb[0].mxu0
    %v520 = vadd.f32 %v387, %v519
    %v521 = vpop.f32.mrb[0].mxu0
    %v522 = vpop.f32.mrb[0].mxu0
    %v523 = vadd.f32 %v392, %v522
    %v524 = vpop.f32.mrb[0].mxu0
    %525 = vmatprep.mubr.bf16.mxu0 0
    %526 = vmatmul.mubr.bf16.gmra.mrb[0].mxu0 %v451
    %v527 = vpop.f32.mrb[0].mxu0
    %v528 = vadd.f32 %v397, %v527
    %v529 = vpop.f32.mrb[0].mxu0
    %v530 = vpop.f32.mrb[0].mxu0
    %v531 = vadd.f32 %v402, %v530
    %v532 = vpop.f32.mrb[0].mxu0
    %533 = vdwg.mxu0
    %v534 = vmax.f32 %v488, 0.0
    %v535 = vmax.f32 %v491, 0.0
    %v536 = vmax.f32 %v496, 0.0
    %v537 = vmax.f32 %v499, 0.0
    %v538 = vmax.f32 %v504, 0.0
    %v539 = vmax.f32 %v507, 0.0
    %v540 = vmax.f32 %v512, 0.0
    %v541 = vmax.f32 %v515, 0.0
    %v542 = vmax.f32 %v520, 0.0
    %v543 = vmax.f32 %v523, 0.0
    %v544 = vmax.f32 %v528, 0.0
    %v545 = vmax.f32 %v531, 0.0
    %v546 = vpack.c.bf16 %v535, %v534
    %v547 = vpack.c.bf16 %v537, %v536
    %v548 = vpack.c.bf16 %v539, %v538
    %v549 = vpack.c.bf16 %v541, %v540
    %v550 = vpack.c.bf16 %v543, %v542
    %v551 = vpack.c.bf16 %v545, %v544
    %v552 = vld [vmem:[%s5] sm:$0xf]
    %v553 = vld [vmem:[%s5 + $0x4] sm:$0xf]
    %v554 = vld [vmem:[%s5 + $0x8] sm:$0xf]
    %v555 = vld [vmem:[%s5 + $0xc] sm:$0xf]
    %v556 = vld [vmem:[%s5 + $0x10] sm:$0xf]
    %v557 = vld [vmem:[%s5 + $0x14] sm:$0xf]
    %v558 = vld [vmem:[%s5 + $0x18] sm:$0xf]
    %v559 = vld [vmem:[%s5 + $0x1c] sm:$0xf]
    %v560 = vld [vmem:[%s5 + $0x20] sm:$0xf]
    %v561 = vld [vmem:[%s5 + $0x24] sm:$0xf]
    %v562 = vld [vmem:[%s5 + $0x28] sm:$0xf]
    %v563 = vld [vmem:[%s5 + $0x2c] sm:$0xf]
    %v564 = vld [vmem:[%s6] sm:$0xff]
    %v565 = vld [vmem:[%s6 + $0x8] sm:$0xff]
    %v566 = vld [vmem:[%s6 + $0x10] sm:$0xff]
    %v567 = vld [vmem:[%s6 + $0x18] sm:$0xff]
    %v568 = vld [vmem:[%s6 + $0x20] sm:$0xff]
    %v569 = vld [vmem:[%s6 + $0x28] sm:$0xff]
    %v570 = vld [vmem:[%s6 + $0x30] sm:$0xff]
    %v571 = vld [vmem:[%s6 + $0x38] sm:$0xff]
    %v572 = vld [vmem:[%s6 + $0x40] sm:$0xff]
    %v573 = vld [vmem:[%s6 + $0x48] sm:$0xff]
    %v574 = vld [vmem:[%s6 + $0x50] sm:$0xff]
    %v575 = vld [vmem:[%s6 + $0x58] sm:$0xff]
    %577 = vset.pattern.permute.xlu0 0
    %578 = vperm.xlu0 %577, %v564
    %v579 = vpop.permute.xlu0 %578
    %582 = vset.pattern.permute.xlu0 0
    %583 = vperm.xlu0 %582, %v565
    %v584 = vpop.permute.xlu0 %583
    %587 = vset.pattern.permute.xlu0 0
    %588 = vperm.xlu0 %587, %v566
    %v589 = vpop.permute.xlu0 %588
    %592 = vset.pattern.permute.xlu0 0
    %593 = vperm.xlu0 %592, %v567
    %v594 = vpop.permute.xlu0 %593
    %597 = vset.pattern.permute.xlu0 0
    %598 = vperm.xlu0 %597, %v568
    %v599 = vpop.permute.xlu0 %598
    %602 = vset.pattern.permute.xlu0 0
    %603 = vperm.xlu0 %602, %v569
    %v604 = vpop.permute.xlu0 %603
    %607 = vset.pattern.permute.xlu0 0
    %608 = vperm.xlu0 %607, %v570
    %v609 = vpop.permute.xlu0 %608
    %612 = vset.pattern.permute.xlu0 0
    %613 = vperm.xlu0 %612, %v571
    %v614 = vpop.permute.xlu0 %613
    %617 = vset.pattern.permute.xlu0 0
    %618 = vperm.xlu0 %617, %v572
    %v619 = vpop.permute.xlu0 %618
    %622 = vset.pattern.permute.xlu0 0
    %623 = vperm.xlu0 %622, %v573
    %v624 = vpop.permute.xlu0 %623
    %627 = vset.pattern.permute.xlu0 0
    %628 = vperm.xlu0 %627, %v574
    %v629 = vpop.permute.xlu0 %628
    %632 = vset.pattern.permute.xlu0 0
    %633 = vperm.xlu0 %632, %v575
    %v634 = vpop.permute.xlu0 %633
    %v648 = vunpack.c.l.b16 %v552
    %v649 = vunpack.c.l.b16 %v553
    %v650 = vunpack.c.l.b16 %v554
    %v651 = vunpack.c.l.b16 %v555
    %v652 = vunpack.c.l.b16 %v556
    %v653 = vunpack.c.l.b16 %v557
    %v654 = vunpack.c.l.b16 %v558
    %v655 = vunpack.c.l.b16 %v559
    %v656 = vunpack.c.l.b16 %v560
    %v657 = vunpack.c.l.b16 %v561
    %v658 = vunpack.c.l.b16 %v562
    %v659 = vunpack.c.l.b16 %v563
    %v660 = vpack.c.b16 %v649, %v648
    %v661 = vpack.c.b16 %v651, %v650
    %v662 = vpack.c.b16 %v653, %v652
    %v663 = vpack.c.b16 %v655, %v654
    %v664 = vpack.c.b16 %v657, %v656
    %v665 = vpack.c.b16 %v659, %v658
    %v667 = vsel %vm434, %v660, 0
    %v670 = vsel %vm434, %v661, 0
    %v673 = vsel %vm434, %v662, 0
    %v676 = vsel %vm434, %v663, 0
    %v679 = vsel %vm434, %v664, 0
    %v682 = vsel %vm434, %v665, 0
    %684 = vmatprep.subr.bf16.mxu0 0
    %685 = vmatpush1.bf16.msra.mxu0 %v546
    %686 = vmatprep.subr.bf16.mxu0 0
    %687 = vmatpush1.bf16.msra.mxu0 %v547
    %688 = vmatprep.subr.bf16.mxu0 0
    %689 = vmatpush1.bf16.msra.mxu0 %v548
    %690 = vmatprep.subr.bf16.mxu0 0
    %691 = vmatpush1.bf16.msra.mxu0 %v549
    %692 = vmatprep.subr.bf16.mxu0 0
    %693 = vmatpush1.bf16.msra.mxu0 %v550
    %694 = vmatprep.subr.bf16.mxu0 0
    %695 = vmatpush1.bf16.msra.mxu0 %v551
    %696 = vmatprep.subr.bf16.mxu0 0
    %697 = vmatpush1.bf16.msra.mxu0 0
    %698 = vmatprep.subr.bf16.mxu0 0
    %699 = vmatpush1.bf16.msra.mxu0 0
    %700 = vmatprep.subr.bf16.mxu0 0
    %701 = vmatpush1.bf16.msra.mxu0 0
    %702 = vmatprep.subr.bf16.mxu0 0
    %703 = vmatpush1.bf16.msra.mxu0 0
    %704 = vmatprep.subr.bf16.mxu0 0
    %705 = vmatpush1.bf16.msra.mxu0 0
    %706 = vmatprep.subr.bf16.mxu0 0
    %707 = vmatpush1.bf16.msra.mxu0 0
    %708 = vmatprep.subr.bf16.mxu0 0
    %709 = vmatpush1.bf16.msra.mxu0 0
    %710 = vmatprep.subr.bf16.mxu0 0
    %711 = vmatpush1.bf16.msra.mxu0 0
    %712 = vmatprep.subr.bf16.mxu0 0
    %713 = vmatpush1.bf16.msra.mxu0 0
    %714 = vmatprep.subr.bf16.mxu0 0
    %715 = vmatpush1.bf16.msra.mxu0 0
    %716 = vmatprep.mubr.bf16.mxu0 0
    %717 = vmatmul.mubr.bf16.gmra.mrb[0].mxu0 %v667
    %v718 = vpop.f32.mrb[0].mxu0
    %v719 = vadd.f32 %v579, %v718
    %v720 = vpop.f32.mrb[0].mxu0
    %v721 = vpop.f32.mrb[0].mxu0
    %v722 = vadd.f32 %v584, %v721
    %v723 = vpop.f32.mrb[0].mxu0
    %724 = vmatprep.mubr.bf16.mxu0 0
    %725 = vmatmul.mubr.bf16.gmra.mrb[0].mxu0 %v670
    %v726 = vpop.f32.mrb[0].mxu0
    %v727 = vadd.f32 %v589, %v726
    %v728 = vpop.f32.mrb[0].mxu0
    %v729 = vpop.f32.mrb[0].mxu0
    %v730 = vadd.f32 %v594, %v729
    %v731 = vpop.f32.mrb[0].mxu0
    %732 = vmatprep.mubr.bf16.mxu0 0
    %733 = vmatmul.mubr.bf16.gmra.mrb[0].mxu0 %v673
    %v734 = vpop.f32.mrb[0].mxu0
    %v735 = vadd.f32 %v599, %v734
    %v736 = vpop.f32.mrb[0].mxu0
    %v737 = vpop.f32.mrb[0].mxu0
    %v738 = vadd.f32 %v604, %v737
    %v739 = vpop.f32.mrb[0].mxu0
    %740 = vmatprep.mubr.bf16.mxu0 0
    %741 = vmatmul.mubr.bf16.gmra.mrb[0].mxu0 %v676
    %v742 = vpop.f32.mrb[0].mxu0
    %v743 = vadd.f32 %v609, %v742
    %v744 = vpop.f32.mrb[0].mxu0
    %v745 = vpop.f32.mrb[0].mxu0
    %v746 = vadd.f32 %v614, %v745
    %v747 = vpop.f32.mrb[0].mxu0
    %748 = vmatprep.mubr.bf16.mxu0 0
    %749 = vmatmul.mubr.bf16.gmra.mrb[0].mxu0 %v679
    %v750 = vpop.f32.mrb[0].mxu0
    %v751 = vadd.f32 %v619, %v750
    %v752 = vpop.f32.mrb[0].mxu0
    %v753 = vpop.f32.mrb[0].mxu0
    %v754 = vadd.f32 %v624, %v753
    %v755 = vpop.f32.mrb[0].mxu0
    %756 = vmatprep.mubr.bf16.mxu0 0
    %757 = vmatmul.mubr.bf16.gmra.mrb[0].mxu0 %v682
    %v758 = vpop.f32.mrb[0].mxu0
    %v759 = vadd.f32 %v629, %v758
    %v760 = vpop.f32.mrb[0].mxu0
    %v761 = vpop.f32.mrb[0].mxu0
    %v762 = vadd.f32 %v634, %v761
    %v763 = vpop.f32.mrb[0].mxu0
    %764 = vdwg.mxu0
    %v765 = vmax.f32 %v719, 0.0
    %v766 = vmax.f32 %v722, 0.0
    %v767 = vmax.f32 %v727, 0.0
    %v768 = vmax.f32 %v730, 0.0
    %v769 = vmax.f32 %v735, 0.0
    %v770 = vmax.f32 %v738, 0.0
    %v771 = vmax.f32 %v743, 0.0
    %v772 = vmax.f32 %v746, 0.0
    %v773 = vmax.f32 %v751, 0.0
    %v774 = vmax.f32 %v754, 0.0
    %v775 = vmax.f32 %v759, 0.0
    %v776 = vmax.f32 %v762, 0.0
    %v777 = vpack.c.bf16 %v766, %v765
    %v778 = vpack.c.bf16 %v768, %v767
    %v779 = vpack.c.bf16 %v770, %v769
    %v780 = vpack.c.bf16 %v772, %v771
    %v781 = vpack.c.bf16 %v774, %v773
    %v782 = vpack.c.bf16 %v776, %v775
    %v783 = vld [vmem:[%s7] sm:$0xf]
    %v784 = vld [vmem:[%s7 + $0x4] sm:$0xf]
    %v785 = vld [vmem:[%s7 + $0x8] sm:$0xf]
    %v786 = vld [vmem:[%s7 + $0xc] sm:$0xf]
    %v787 = vld [vmem:[%s7 + $0x10] sm:$0xf]
    %v788 = vld [vmem:[%s7 + $0x14] sm:$0xf]
    %v789 = vld [vmem:[%s7 + $0x18] sm:$0xf]
    %v790 = vld [vmem:[%s7 + $0x1c] sm:$0xf]
    %v791 = vld [vmem:[%s7 + $0x20] sm:$0xf]
    %v792 = vld [vmem:[%s7 + $0x24] sm:$0xf]
    %v793 = vld [vmem:[%s7 + $0x28] sm:$0xf]
    %v794 = vld [vmem:[%s7 + $0x2c] sm:$0xf]
    %v795 = vld [vmem:[%s8] sm:$0xff]
    %v796 = vld [vmem:[%s8 + $0x8] sm:$0xff]
    %v797 = vld [vmem:[%s8 + $0x10] sm:$0xff]
    %v798 = vld [vmem:[%s8 + $0x18] sm:$0xff]
    %v799 = vld [vmem:[%s8 + $0x20] sm:$0xff]
    %v800 = vld [vmem:[%s8 + $0x28] sm:$0xff]
    %v801 = vld [vmem:[%s8 + $0x30] sm:$0xff]
    %v802 = vld [vmem:[%s8 + $0x38] sm:$0xff]
    %v803 = vld [vmem:[%s8 + $0x40] sm:$0xff]
    %v804 = vld [vmem:[%s8 + $0x48] sm:$0xff]
    %v805 = vld [vmem:[%s8 + $0x50] sm:$0xff]
    %v806 = vld [vmem:[%s8 + $0x58] sm:$0xff]
    %808 = vset.pattern.permute.xlu0 0
    %809 = vperm.xlu0 %808, %v795
    %v810 = vpop.permute.xlu0 %809
    %813 = vset.pattern.permute.xlu0 0
    %814 = vperm.xlu0 %813, %v796
    %v815 = vpop.permute.xlu0 %814
    %818 = vset.pattern.permute.xlu0 0
    %819 = vperm.xlu0 %818, %v797
    %v820 = vpop.permute.xlu0 %819
    %823 = vset.pattern.permute.xlu0 0
    %824 = vperm.xlu0 %823, %v798
    %v825 = vpop.permute.xlu0 %824
    %828 = vset.pattern.permute.xlu0 0
    %829 = vperm.xlu0 %828, %v799
    %v830 = vpop.permute.xlu0 %829
    %833 = vset.pattern.permute.xlu0 0
    %834 = vperm.xlu0 %833, %v800
    %v835 = vpop.permute.xlu0 %834
    %838 = vset.pattern.permute.xlu0 0
    %839 = vperm.xlu0 %838, %v801
    %v840 = vpop.permute.xlu0 %839
    %843 = vset.pattern.permute.xlu0 0
    %844 = vperm.xlu0 %843, %v802
    %v845 = vpop.permute.xlu0 %844
    %848 = vset.pattern.permute.xlu0 0
    %849 = vperm.xlu0 %848, %v803
    %v850 = vpop.permute.xlu0 %849
    %853 = vset.pattern.permute.xlu0 0
    %854 = vperm.xlu0 %853, %v804
    %v855 = vpop.permute.xlu0 %854
    %858 = vset.pattern.permute.xlu0 0
    %859 = vperm.xlu0 %858, %v805
    %v860 = vpop.permute.xlu0 %859
    %863 = vset.pattern.permute.xlu0 0
    %864 = vperm.xlu0 %863, %v806
    %v865 = vpop.permute.xlu0 %864
    %v879 = vunpack.c.l.b16 %v783
    %v880 = vunpack.c.l.b16 %v784
    %v881 = vunpack.c.l.b16 %v785
    %v882 = vunpack.c.l.b16 %v786
    %v883 = vunpack.c.l.b16 %v787
    %v884 = vunpack.c.l.b16 %v788
    %v885 = vunpack.c.l.b16 %v789
    %v886 = vunpack.c.l.b16 %v790
    %v887 = vunpack.c.l.b16 %v791
    %v888 = vunpack.c.l.b16 %v792
    %v889 = vunpack.c.l.b16 %v793
    %v890 = vunpack.c.l.b16 %v794
    %v891 = vpack.c.b16 %v880, %v879
    %v892 = vpack.c.b16 %v882, %v881
    %v893 = vpack.c.b16 %v884, %v883
    %v894 = vpack.c.b16 %v886, %v885
    %v895 = vpack.c.b16 %v888, %v887
    %v896 = vpack.c.b16 %v890, %v889
    %v898 = vsel %vm434, %v891, 0
    %v901 = vsel %vm434, %v892, 0
    %v904 = vsel %vm434, %v893, 0
    %v907 = vsel %vm434, %v894, 0
    %v910 = vsel %vm434, %v895, 0
    %v913 = vsel %vm434, %v896, 0
    %915 = vmatprep.subr.bf16.mxu0 0
    %916 = vmatpush1.bf16.msra.mxu0 %v777
    %917 = vmatprep.subr.bf16.mxu0 0
    %918 = vmatpush1.bf16.msra.mxu0 %v778
    %919 = vmatprep.subr.bf16.mxu0 0
    %920 = vmatpush1.bf16.msra.mxu0 %v779
    %921 = vmatprep.subr.bf16.mxu0 0
    %922 = vmatpush1.bf16.msra.mxu0 %v780
    %923 = vmatprep.subr.bf16.mxu0 0
    %924 = vmatpush1.bf16.msra.mxu0 %v781
    %925 = vmatprep.subr.bf16.mxu0 0
    %926 = vmatpush1.bf16.msra.mxu0 %v782
    %927 = vmatprep.subr.bf16.mxu0 0
    %928 = vmatpush1.bf16.msra.mxu0 0
    %929 = vmatprep.subr.bf16.mxu0 0
    %930 = vmatpush1.bf16.msra.mxu0 0
    %931 = vmatprep.subr.bf16.mxu0 0
    %932 = vmatpush1.bf16.msra.mxu0 0
    %933 = vmatprep.subr.bf16.mxu0 0
    %934 = vmatpush1.bf16.msra.mxu0 0
    %935 = vmatprep.subr.bf16.mxu0 0
    %936 = vmatpush1.bf16.msra.mxu0 0
    %937 = vmatprep.subr.bf16.mxu0 0
    %938 = vmatpush1.bf16.msra.mxu0 0
    %939 = vmatprep.subr.bf16.mxu0 0
    %940 = vmatpush1.bf16.msra.mxu0 0
    %941 = vmatprep.subr.bf16.mxu0 0
    %942 = vmatpush1.bf16.msra.mxu0 0
    %943 = vmatprep.subr.bf16.mxu0 0
    %944 = vmatpush1.bf16.msra.mxu0 0
    %945 = vmatprep.subr.bf16.mxu0 0
    %946 = vmatpush1.bf16.msra.mxu0 0
    %947 = vmatprep.mubr.bf16.mxu0 0
    %948 = vmatmul.mubr.bf16.gmra.mrb[0].mxu0 %v898
    %v949 = vpop.f32.mrb[0].mxu0
    %v950 = vadd.f32 %v810, %v949
    %v951 = vpop.f32.mrb[0].mxu0
    %v952 = vpop.f32.mrb[0].mxu0
    %v953 = vadd.f32 %v815, %v952
    %v954 = vpop.f32.mrb[0].mxu0
    %955 = vmatprep.mubr.bf16.mxu0 0
    %956 = vmatmul.mubr.bf16.gmra.mrb[0].mxu0 %v901
    %v957 = vpop.f32.mrb[0].mxu0
    %v958 = vadd.f32 %v820, %v957
    %v959 = vpop.f32.mrb[0].mxu0
    %v960 = vpop.f32.mrb[0].mxu0
    %v961 = vadd.f32 %v825, %v960
    %v962 = vpop.f32.mrb[0].mxu0
    %963 = vmatprep.mubr.bf16.mxu0 0
    %964 = vmatmul.mubr.bf16.gmra.mrb[0].mxu0 %v904
    %v965 = vpop.f32.mrb[0].mxu0
    %v966 = vadd.f32 %v830, %v965
    %v967 = vpop.f32.mrb[0].mxu0
    %v968 = vpop.f32.mrb[0].mxu0
    %v969 = vadd.f32 %v835, %v968
    %v970 = vpop.f32.mrb[0].mxu0
    %971 = vmatprep.mubr.bf16.mxu0 0
    %972 = vmatmul.mubr.bf16.gmra.mrb[0].mxu0 %v907
    %v973 = vpop.f32.mrb[0].mxu0
    %v974 = vadd.f32 %v840, %v973
    %v975 = vpop.f32.mrb[0].mxu0
    %v976 = vpop.f32.mrb[0].mxu0
    %v977 = vadd.f32 %v845, %v976
    %v978 = vpop.f32.mrb[0].mxu0
    %979 = vmatprep.mubr.bf16.mxu0 0
    %980 = vmatmul.mubr.bf16.gmra.mrb[0].mxu0 %v910
    %v981 = vpop.f32.mrb[0].mxu0
    %v982 = vadd.f32 %v850, %v981
    %v983 = vpop.f32.mrb[0].mxu0
    %v984 = vpop.f32.mrb[0].mxu0
    %v985 = vadd.f32 %v855, %v984
    %v986 = vpop.f32.mrb[0].mxu0
    %987 = vmatprep.mubr.bf16.mxu0 0
    %988 = vmatmul.mubr.bf16.gmra.mrb[0].mxu0 %v913
    %v989 = vpop.f32.mrb[0].mxu0
    %v990 = vadd.f32 %v860, %v989
    %v991 = vpop.f32.mrb[0].mxu0
    %v992 = vpop.f32.mrb[0].mxu0
    %v993 = vadd.f32 %v865, %v992
    %v994 = vpop.f32.mrb[0].mxu0
    %995 = vdwg.mxu0
    %v996 = vmax.f32 %v950, 0.0
    %v997 = vmax.f32 %v953, 0.0
    %v998 = vmax.f32 %v958, 0.0
    %v999 = vmax.f32 %v961, 0.0
    %v1000 = vmax.f32 %v966, 0.0
    %v1001 = vmax.f32 %v969, 0.0
    %v1002 = vmax.f32 %v974, 0.0
    %v1003 = vmax.f32 %v977, 0.0
    %v1004 = vmax.f32 %v982, 0.0
    %v1005 = vmax.f32 %v985, 0.0
    %v1006 = vmax.f32 %v990, 0.0
    %v1007 = vmax.f32 %v993, 0.0
    %v1008 = vpack.c.bf16 %v997, %v996
    %v1009 = vpack.c.bf16 %v999, %v998
    %v1010 = vpack.c.bf16 %v1001, %v1000
    %v1011 = vpack.c.bf16 %v1003, %v1002
    %v1012 = vpack.c.bf16 %v1005, %v1004
    %v1013 = vpack.c.bf16 %v1007, %v1006
    %v1014 = vld [vmem:[%s9] sm:$0xf]
    %v1015 = vld [vmem:[%s9 + $0x4] sm:$0xf]
    %v1016 = vld [vmem:[%s9 + $0x8] sm:$0xf]
    %v1017 = vld [vmem:[%s9 + $0xc] sm:$0xf]
    %v1018 = vld [vmem:[%s9 + $0x10] sm:$0xf]
    %v1019 = vld [vmem:[%s9 + $0x14] sm:$0xf]
    %v1020 = vld [vmem:[%s9 + $0x18] sm:$0xf]
    %v1021 = vld [vmem:[%s9 + $0x1c] sm:$0xf]
    %v1022 = vld [vmem:[%s10] sm:$0xff]
    %v1023 = vld [vmem:[%s10 + $0x8] sm:$0xff]
    %v1024 = vld [vmem:[%s10 + $0x10] sm:$0xff]
    %v1025 = vld [vmem:[%s10 + $0x18] sm:$0xff]
    %v1026 = vld [vmem:[%s10 + $0x20] sm:$0xff]
    %v1027 = vld [vmem:[%s10 + $0x28] sm:$0xff]
    %v1028 = vld [vmem:[%s10 + $0x30] sm:$0xff]
    %v1029 = vld [vmem:[%s10 + $0x38] sm:$0xff]
    %1031 = vset.pattern.permute.xlu0 0
    %1032 = vperm.xlu0 %1031, %v1022
    %v1033 = vpop.permute.xlu0 %1032
    %1036 = vset.pattern.permute.xlu0 0
    %1037 = vperm.xlu0 %1036, %v1023
    %v1038 = vpop.permute.xlu0 %1037
    %1041 = vset.pattern.permute.xlu0 0
    %1042 = vperm.xlu0 %1041, %v1024
    %v1043 = vpop.permute.xlu0 %1042
    %1046 = vset.pattern.permute.xlu0 0
    %1047 = vperm.xlu0 %1046, %v1025
    %v1048 = vpop.permute.xlu0 %1047
    %1051 = vset.pattern.permute.xlu0 0
    %1052 = vperm.xlu0 %1051, %v1026
    %v1053 = vpop.permute.xlu0 %1052
    %1056 = vset.pattern.permute.xlu0 0
    %1057 = vperm.xlu0 %1056, %v1027
    %v1058 = vpop.permute.xlu0 %1057
    %1061 = vset.pattern.permute.xlu0 0
    %1062 = vperm.xlu0 %1061, %v1028
    %v1063 = vpop.permute.xlu0 %1062
    %1066 = vset.pattern.permute.xlu0 0
    %1067 = vperm.xlu0 %1066, %v1029
    %v1068 = vpop.permute.xlu0 %1067
    %v1078 = vunpack.c.l.b16 %v1014
    %v1079 = vunpack.c.l.b16 %v1015
    %v1080 = vunpack.c.l.b16 %v1016
    %v1081 = vunpack.c.l.b16 %v1017
    %v1082 = vunpack.c.l.b16 %v1018
    %v1083 = vunpack.c.l.b16 %v1019
    %v1084 = vunpack.c.l.b16 %v1020
    %v1085 = vunpack.c.l.b16 %v1021
    %v1086 = vpack.c.b16 %v1079, %v1078
    %v1087 = vpack.c.b16 %v1081, %v1080
    %v1088 = vpack.c.b16 %v1083, %v1082
    %v1089 = vpack.c.b16 %v1085, %v1084
    %v1091 = vsel %vm434, %v1086, 0
    %v1094 = vsel %vm434, %v1087, 0
    %v1097 = vsel %vm434, %v1088, 0
    %v1100 = vsel %vm434, %v1089, 0
    %1102 = vmatprep.subr.bf16.mxu0 0
    %1103 = vmatpush1.bf16.msra.mxu0 %v1008
    %1104 = vmatprep.subr.bf16.mxu0 0
    %1105 = vmatpush1.bf16.msra.mxu0 %v1009
    %1106 = vmatprep.subr.bf16.mxu0 0
    %1107 = vmatpush1.bf16.msra.mxu0 %v1010
    %1108 = vmatprep.subr.bf16.mxu0 0
    %1109 = vmatpush1.bf16.msra.mxu0 %v1011
    %1110 = vmatprep.subr.bf16.mxu0 0
    %1111 = vmatpush1.bf16.msra.mxu0 %v1012
    %1112 = vmatprep.subr.bf16.mxu0 0
    %1113 = vmatpush1.bf16.msra.mxu0 %v1013
    %1114 = vmatprep.subr.bf16.mxu0 0
    %1115 = vmatpush1.bf16.msra.mxu0 0
    %1116 = vmatprep.subr.bf16.mxu0 0
    %1117 = vmatpush1.bf16.msra.mxu0 0
    %1118 = vmatprep.subr.bf16.mxu0 0
    %1119 = vmatpush1.bf16.msra.mxu0 0
    %1120 = vmatprep.subr.bf16.mxu0 0
    %1121 = vmatpush1.bf16.msra.mxu0 0
    %1122 = vmatprep.subr.bf16.mxu0 0
    %1123 = vmatpush1.bf16.msra.mxu0 0
    %1124 = vmatprep.subr.bf16.mxu0 0
    %1125 = vmatpush1.bf16.msra.mxu0 0
    %1126 = vmatprep.subr.bf16.mxu0 0
    %1127 = vmatpush1.bf16.msra.mxu0 0
    %1128 = vmatprep.subr.bf16.mxu0 0
    %1129 = vmatpush1.bf16.msra.mxu0 0
    %1130 = vmatprep.subr.bf16.mxu0 0
    %1131 = vmatpush1.bf16.msra.mxu0 0
    %1132 = vmatprep.subr.bf16.mxu0 0
    %1133 = vmatpush1.bf16.msra.mxu0 0
    %1134 = vmatprep.mubr.bf16.mxu0 0
    %1135 = vmatmul.mubr.bf16.gmra.mrb[0].mxu0 %v1091
    %v1136 = vpop.f32.mrb[0].mxu0
    %v1137 = vadd.f32 %v1033, %v1136
    %v1138 = vpop.f32.mrb[0].mxu0
    %v1139 = vpop.f32.mrb[0].mxu0
    %v1140 = vadd.f32 %v1038, %v1139
    %v1141 = vpop.f32.mrb[0].mxu0
    %1142 = vmatprep.mubr.bf16.mxu0 0
    %1143 = vmatmul.mubr.bf16.gmra.mrb[0].mxu0 %v1094
    %v1144 = vpop.f32.mrb[0].mxu0
    %v1145 = vadd.f32 %v1043, %v1144
    %v1146 = vpop.f32.mrb[0].mxu0
    %v1147 = vpop.f32.mrb[0].mxu0
    %v1148 = vadd.f32 %v1048, %v1147
    %v1149 = vpop.f32.mrb[0].mxu0
    %1150 = vmatprep.mubr.bf16.mxu0 0
    %1151 = vmatmul.mubr.bf16.gmra.mrb[0].mxu0 %v1097
    %v1152 = vpop.f32.mrb[0].mxu0
    %v1153 = vadd.f32 %v1053, %v1152
    %v1154 = vpop.f32.mrb[0].mxu0
    %v1155 = vpop.f32.mrb[0].mxu0
    %v1156 = vadd.f32 %v1058, %v1155
    %v1157 = vpop.f32.mrb[0].mxu0
    %1158 = vmatprep.mubr.bf16.mxu0 0
    %1159 = vmatmul.mubr.bf16.gmra.mrb[0].mxu0 %v1100
    %v1160 = vpop.f32.mrb[0].mxu0
    %v1161 = vadd.f32 %v1063, %v1160
    %v1162 = vpop.f32.mrb[0].mxu0
    %v1163 = vpop.f32.mrb[0].mxu0
    %v1164 = vadd.f32 %v1068, %v1163
    %v1165 = vpop.f32.mrb[0].mxu0
    %1166 = vdwg.mxu0
    %1167 = vst [vmem:[#allocation2] sm:$0xff] %v1137
    %1168 = vst [vmem:[#allocation2 + $0x8] sm:$0xff] %v1140
    %1169 = vst [vmem:[#allocation2 + $0x10] sm:$0xff] %v1145
    %1170 = vst [vmem:[#allocation2 + $0x18] sm:$0xff] %v1148
    %1171 = vst [vmem:[#allocation2 + $0x20] sm:$0xff] %v1153
    %1172 = vst [vmem:[#allocation2 + $0x28] sm:$0xff] %v1156
    %1173 = vst [vmem:[#allocation2 + $0x30] sm:$0xff] %v1161
    %1174 = vst [vmem:[#allocation2 + $0x38] sm:$0xff] %v1164
    // Predicated region
    $region46: #{tpu_custom_call.1} parent=1 // pred_check
      _
    $region47: #{tpu_custom_call.1} parent=1 // pred_check_branch
      %1176 = sbr.rel (0) target = $region49
    $region48: #{tpu_custom_call.1} parent=1 // pred_region
      %s1178 = ssub.s32 1024, 1024
      %1179 = vsyncadd [#allocation3], %s1178
      %s1180 = sshll.u32 [#allocation2], 4
      %s1181 = int_to_ptr.vmem [resolvable:$true] %s1180
      %1186 = dma.vmem_to_hbm [thread:$0]  %s1181, 1024, %s11, [#allocation3], 128, 128, 8
    $region49: #{tpu_custom_call.1} parent=1 // pred_fallthru
      _
    // Predicated region
    $region50: #{tpu_custom_call.1} parent=1 // pred_check
      _
    $region51: #{tpu_custom_call.1} parent=1 // pred_check_branch
      %1188 = sbr.rel (0) target = $region53
    $region52: #{tpu_custom_call.1} parent=1 // pred_region
      %1189 = dma.done [#allocation3], 1024
    $region53: #{tpu_custom_call.1} parent=1 // pred_fallthru
      _
    %1190 = vsyncpa [#allocation3], 1

</llo_original>
